<compile_context>
chip_gen: v7x
topology: tpu7x:2x2x1
jax: 0.10.0
libtpu: 0.0.40
codegen_flags: <defaults>
</compile_context>

<pallas_src>
import functools

import jax
import jax.numpy as jnp
from jax.experimental import pallas as pl
from jax.experimental.pallas import tpu as pltpu


def _round_up(a, m):
    return ((a + m - 1) // m) * m


def fused_moe_kernel(x_ref, w1_ref, b1_ref, w2_ref, b2_ref, wg_ref, bg_ref, o_ref,
                     *, top_k, out_pad):
    x = x_ref[...]                                   # (TB, D), compute dtype (bf16)
    tb = x.shape[0]
    num_experts = w1_ref.shape[0]
    num_gates = wg_ref.shape[0]
    o_dim = w2_ref.shape[-1]
    compute_dtype = x.dtype

    # --- all expert MLPs (statically unrolled; num_experts is small) ---
    expert_outs = []
    for e in range(num_experts):
        h = jnp.dot(x, w1_ref[e], preferred_element_type=jnp.float32) + b1_ref[e]
        h = jnp.maximum(h, 0.0).astype(compute_dtype)
        eo = jnp.dot(h, w2_ref[e], preferred_element_type=jnp.float32) + b2_ref[e]
        expert_outs.append(eo)                       # (TB, O) f32

    iota_e = jax.lax.broadcasted_iota(jnp.int32, (tb, num_experts), 1)
    neg_big = jnp.float32(-1e30)

    mixes = []
    for g in range(num_gates):
        # gating logits: x @ Wg[g] + bg[g]  (weight already (D, E): no transpose needed)
        logits = jnp.dot(x, wg_ref[g], preferred_element_type=jnp.float32) + bg_ref[g]

        # iterative top-k: value + one-hot of the argmax (first index wins on ties)
        remaining = logits
        vals, onehots = [], []
        for _ in range(top_k):
            m = jnp.max(remaining, axis=-1, keepdims=True)              # (TB, 1)
            is_max = remaining == m
            first = jnp.min(jnp.where(is_max, iota_e, num_experts),
                            axis=-1, keepdims=True)                     # (TB, 1)
            onehot = iota_e == first                                     # (TB, E)
            vals.append(m)
            onehots.append(onehot)
            remaining = jnp.where(onehot, neg_big, remaining)

        # softmax over the k selected logits (vals[0] is the running max)
        exps = [jnp.exp(v - vals[0]) for v in vals]
        denom = exps[0]
        for ek in exps[1:]:
            denom = denom + ek
        inv = pl.reciprocal(denom, approx=True)                          # EUP slot, ~free

        # combined per-expert gate weights, then mix the expert outputs
        w_comb = jnp.zeros((tb, num_experts), jnp.float32)
        for kk in range(top_k):
            w_comb = w_comb + onehots[kk].astype(jnp.float32) * (exps[kk] * inv)
        mix = jnp.zeros((tb, o_dim), jnp.float32)
        for e in range(num_experts):
            mix = mix + w_comb[:, e:e + 1] * expert_outs[e]
        mixes.append(mix)

    out = jnp.concatenate(mixes, axis=-1)                                # (TB, G*O)
    pad = out_pad - out.shape[-1]
    if pad > 0:  # lane-dense output slab (multiple of 128 lanes)
        out = jnp.concatenate([out, jnp.zeros((tb, pad), jnp.float32)], axis=-1)
    o_ref[...] = out.astype(o_ref.dtype)


def prepare_moe_params(expert_params, gate_params):
    """Pre-transpose PyTorch-layout (out, in) weights to (in, out) and stack them."""
    w1 = jnp.stack([p[0].T for p in expert_params])            # (E, D, H)
    b1 = jnp.stack([p[1][None, :] for p in expert_params])     # (E, 1, H)
    w2 = jnp.stack([p[2].T for p in expert_params])            # (E, H, O)
    b2 = jnp.stack([p[3][None, :] for p in expert_params])     # (E, 1, O)
    wg = jnp.stack([g[0].T for g in gate_params])              # (G, D, E)
    bg = jnp.stack([g[1][None, :] for g in gate_params])       # (G, 1, E)
    return w1, b1, w2, b2, wg, bg


def fused_moe(x, w1, b1, w2, b2, wg, bg, *, top_k,
              compute_dtype=jnp.bfloat16, row_tile=512):
    """Fused experts + 3 gating networks + top-k softmax mixing.

    Returns (B, 3*moe_output_dim): [forecast | fail | rca] MoE outputs, f32.
    """
    B, D = x.shape
    E, D1, H = w1.shape
    E2, H2, O = w2.shape
    G, D2, E3 = wg.shape
    assert D == D1 == D2 and E == E2 == E3 and H == H2

    out_dim = G * O
    out_pad = _round_up(out_dim, 128)                 # lane-dense output store

    row_tile = _round_up(min(row_tile, max(B, 8)), 8)
    b_pad = _round_up(B, row_tile)
    grid = (b_pad // row_tile,)

    # bf16 inputs / weights at the call boundary, f32 accumulation inside.
    xc = x.astype(compute_dtype)
    if b_pad != B:
        xc = jnp.pad(xc, ((0, b_pad - B), (0, 0)))
    w1c = w1.astype(compute_dtype)
    w2c = w2.astype(compute_dtype)
    wgc = wg.astype(compute_dtype)

    kernel = functools.partial(fused_moe_kernel, top_k=top_k, out_pad=out_pad)

    out = pl.pallas_call(
        kernel,
        out_shape=jax.ShapeDtypeStruct((b_pad, out_pad), jnp.float32),
        grid=grid,
        in_specs=[
            pl.BlockSpec((row_tile, D), lambda i: (i, 0)),
            # weights/biases: full-array blocks with constant index -> DMA'd once, resident
            pl.BlockSpec((E, D, H), lambda i: (0, 0, 0)),
            pl.BlockSpec((E, 1, H), lambda i: (0, 0, 0)),
            pl.BlockSpec((E, H, O), lambda i: (0, 0, 0)),
            pl.BlockSpec((E, 1, O), lambda i: (0, 0, 0)),
            pl.BlockSpec((G, D, E), lambda i: (0, 0, 0)),
            pl.BlockSpec((G, 1, E), lambda i: (0, 0, 0)),
        ],
        out_specs=pl.BlockSpec((row_tile, out_pad), lambda i: (i, 0)),
        compiler_params=pltpu.CompilerParams(
            dimension_semantics=("parallel",)),
    )(xc, w1c, b1, w2c, b2, wgc, bg)

    return out[:B, :out_dim]


def moe_reference(x, w1, b1, w2, b2, wg, bg, *, top_k, compute_dtype):
    """Pure-JAX reference mirroring the PyTorch experts + _apply_moe semantics,
    using the same bf16 input quantization as the kernel."""
    q = lambda a: a.astype(compute_dtype).astype(jnp.float32)
    xq = q(x)
    h = jnp.einsum("bd,edh->beh", xq, q(w1)) + b1[None, :, 0, :]
    h = q(jnp.maximum(h, 0.0))
    expert_out = jnp.einsum("beh,eho->beo", h, q(w2)) + b2[None, :, 0, :]   # (B, E, O)
    outs = []
    for g in range(wg.shape[0]):
        logits = xq @ q(wg[g]) + bg[g, 0][None, :]
        vals, idx = jax.lax.top_k(logits, top_k)
        gates = jax.nn.softmax(vals, axis=-1)
        chosen = jnp.take_along_axis(expert_out, idx[:, :, None], axis=1)    # (B, K, O)
        outs.append(jnp.sum(chosen * gates[:, :, None], axis=1))
    return jnp.concatenate(outs, axis=-1)


if __name__ == "__main__":
    # MoE block of FoundationalTimeSeriesModelV2:
    #   moe_global_input_dim = TRANSFORMER_D_MODEL = 64, num_experts = 8,
    #   moe_hidden_dim_expert = 32, moe_output_dim = 32, moe_top_k = 2, batch = 8.
    B, D, E, H, O, K = 8, 64, 8, 32, 32, 2

    key = jax.random.PRNGKey(0)
    k_x, k_params = jax.random.split(key)
    pkeys = jax.random.split(k_params, 2 * E + 3)

    def linear_init(k, out_dim, in_dim):
        # nn.Linear default init: U(-1/sqrt(fan_in), 1/sqrt(fan_in)), weight layout (out, in)
        kw, kb = jax.random.split(k)
        bound = 1.0 / (in_dim ** 0.5)
        w = jax.random.uniform(kw, (out_dim, in_dim), jnp.float32, -bound, bound)
        b = jax.random.uniform(kb, (out_dim,), jnp.float32, -bound, bound)
        return w, b

    experts = []
    for e in range(E):
        w1_t, b1_t = linear_init(pkeys[2 * e], H, D)        # Expert fc1
        w2_t, b2_t = linear_init(pkeys[2 * e + 1], O, H)    # Expert fc2
        experts.append((w1_t, b1_t, w2_t, b2_t))
    gates = [linear_init(pkeys[2 * E + g], E, D) for g in range(3)]  # forecast / fail / rca

    x = jax.random.normal(k_x, (B, D), jnp.float32)          # global_moe_input

    w1, b1, w2, b2, wg, bg = prepare_moe_params(experts, gates)

    out = fused_moe(x, w1, b1, w2, b2, wg, bg, top_k=K)
    out = jax.block_until_ready(out)

    ref = moe_reference(x, w1, b1, w2, b2, wg, bg, top_k=K,
                        compute_dtype=jnp.bfloat16)

    assert out.shape == (B, 3 * O)
    assert bool(jnp.all(jnp.isfinite(out)))
    assert jnp.allclose(out, ref, atol=2e-2, rtol=2e-2), "mismatch vs reference"

    print("KERNEL_OK")
</pallas_src>

<mosaic_0001>
module attributes {stable_mosaic.version = 11 : i64} {
  func.func @fused_moe_kernel(%arg0: i32, %arg1: memref<8x64xbf16, #tpu.memory_space<vmem>>, %arg2: memref<8x64x32xbf16, #tpu.memory_space<vmem>>, %arg3: memref<8x1x32xf32, #tpu.memory_space<vmem>>, %arg4: memref<8x32x32xbf16, #tpu.memory_space<vmem>>, %arg5: memref<8x1x32xf32, #tpu.memory_space<vmem>>, %arg6: memref<3x64x8xbf16, #tpu.memory_space<vmem>>, %arg7: memref<3x1x8xf32, #tpu.memory_space<vmem>>, %arg8: memref<8x128xf32, #tpu.memory_space<vmem>>) attributes {dimension_semantics = [#tpu.dimension_semantics<parallel>], iteration_bounds = array<i64: 1>, scalar_prefetch = 0 : i64, scratch_operands = 0 : i64, tpu.core_type = #tpu.core_type<tc>, window_params = [{transform_indices = @transform_0, window_bounds = array<i64: 8, 64>}, {pipeline_mode = #tpu.pipeline_mode<synchronous>, transform_indices = @transform_1, window_bounds = array<i64: 8, 64, 32>}, {pipeline_mode = #tpu.pipeline_mode<synchronous>, transform_indices = @transform_2, window_bounds = array<i64: 8, 1, 32>}, {pipeline_mode = #tpu.pipeline_mode<synchronous>, transform_indices = @transform_3, window_bounds = array<i64: 8, 32, 32>}, {pipeline_mode = #tpu.pipeline_mode<synchronous>, transform_indices = @transform_4, window_bounds = array<i64: 8, 1, 32>}, {pipeline_mode = #tpu.pipeline_mode<synchronous>, transform_indices = @transform_5, window_bounds = array<i64: 3, 64, 8>}, {pipeline_mode = #tpu.pipeline_mode<synchronous>, transform_indices = @transform_6, window_bounds = array<i64: 3, 1, 8>}, {transform_indices = @transform_7, window_bounds = array<i64: 8, 128>}]} {
    %c0 = arith.constant 0 : index
    %c0_0 = arith.constant 0 : index
    %0 = vector.load %arg1[%c0, %c0_0] : memref<8x64xbf16, #tpu.memory_space<vmem>>, vector<8x64xbf16>
    %c0_1 = arith.constant 0 : index
    %c0_2 = arith.constant 0 : index
    %c0_3 = arith.constant 0 : index
    %1 = vector.load %arg2[%c0_1, %c0_2, %c0_3] : memref<8x64x32xbf16, #tpu.memory_space<vmem>>, vector<1x64x32xbf16>
    %2 = vector.shape_cast %1 : vector<1x64x32xbf16> to vector<64x32xbf16>
    %cst = arith.constant dense<0.000000e+00> : vector<8x32xf32>
    %3 = tpu.matmul %0, %2, %cst {dimension_numbers = #tpu.dot_dimension_numbers<[1], [0], [0], [1], [0, 0, 1, 1], [], []>} : vector<8x64xbf16>, vector<64x32xbf16>, vector<8x32xf32> -> vector<8x32xf32>
    %c0_4 = arith.constant 0 : index
    %c0_5 = arith.constant 0 : index
    %c0_6 = arith.constant 0 : index
    %4 = vector.load %arg3[%c0_4, %c0_5, %c0_6] : memref<8x1x32xf32, #tpu.memory_space<vmem>>, vector<1x1x32xf32>
    %5 = vector.shape_cast %4 : vector<1x1x32xf32> to vector<1x32xf32>
    %6 = vector.broadcast %5 : vector<1x32xf32> to vector<8x32xf32>
    %7 = arith.addf %3, %6 : vector<8x32xf32>
    %cst_7 = arith.constant 0.000000e+00 : f32
    %8 = vector.broadcast %cst_7 : f32 to vector<8x32xf32>
    %9 = arith.maximumf %7, %8 : vector<8x32xf32>
    %10 = arith.truncf %9 : vector<8x32xf32> to vector<8x32xbf16>
    %c0_8 = arith.constant 0 : index
    %c0_9 = arith.constant 0 : index
    %c0_10 = arith.constant 0 : index
    %11 = vector.load %arg4[%c0_8, %c0_9, %c0_10] : memref<8x32x32xbf16, #tpu.memory_space<vmem>>, vector<1x32x32xbf16>
    %12 = vector.shape_cast %11 : vector<1x32x32xbf16> to vector<32x32xbf16>
    %cst_11 = arith.constant dense<0.000000e+00> : vector<8x32xf32>
    %13 = tpu.matmul %10, %12, %cst_11 {dimension_numbers = #tpu.dot_dimension_numbers<[1], [0], [0], [1], [0, 0, 1, 1], [], []>} : vector<8x32xbf16>, vector<32x32xbf16>, vector<8x32xf32> -> vector<8x32xf32>
    %c0_12 = arith.constant 0 : index
    %c0_13 = arith.constant 0 : index
    %c0_14 = arith.constant 0 : index
    %14 = vector.load %arg5[%c0_12, %c0_13, %c0_14] : memref<8x1x32xf32, #tpu.memory_space<vmem>>, vector<1x1x32xf32>
    %15 = vector.shape_cast %14 : vector<1x1x32xf32> to vector<1x32xf32>
    %16 = vector.broadcast %15 : vector<1x32xf32> to vector<8x32xf32>
    %17 = arith.addf %13, %16 : vector<8x32xf32>
    %c1 = arith.constant 1 : index
    %c0_15 = arith.constant 0 : index
    %c0_16 = arith.constant 0 : index
    %18 = vector.load %arg2[%c1, %c0_15, %c0_16] : memref<8x64x32xbf16, #tpu.memory_space<vmem>>, vector<1x64x32xbf16>
    %19 = vector.shape_cast %18 : vector<1x64x32xbf16> to vector<64x32xbf16>
    %cst_17 = arith.constant dense<0.000000e+00> : vector<8x32xf32>
    %20 = tpu.matmul %0, %19, %cst_17 {dimension_numbers = #tpu.dot_dimension_numbers<[1], [0], [0], [1], [0, 0, 1, 1], [], []>} : vector<8x64xbf16>, vector<64x32xbf16>, vector<8x32xf32> -> vector<8x32xf32>
    %c1_18 = arith.constant 1 : index
    %c0_19 = arith.constant 0 : index
    %c0_20 = arith.constant 0 : index
    %21 = vector.load %arg3[%c1_18, %c0_19, %c0_20] : memref<8x1x32xf32, #tpu.memory_space<vmem>>, vector<1x1x32xf32>
    %22 = vector.shape_cast %21 : vector<1x1x32xf32> to vector<1x32xf32>
    %23 = vector.broadcast %22 : vector<1x32xf32> to vector<8x32xf32>
    %24 = arith.addf %20, %23 : vector<8x32xf32>
    %cst_21 = arith.constant 0.000000e+00 : f32
    %25 = vector.broadcast %cst_21 : f32 to vector<8x32xf32>
    %26 = arith.maximumf %24, %25 : vector<8x32xf32>
    %27 = arith.truncf %26 : vector<8x32xf32> to vector<8x32xbf16>
    %c1_22 = arith.constant 1 : index
    %c0_23 = arith.constant 0 : index
    %c0_24 = arith.constant 0 : index
    %28 = vector.load %arg4[%c1_22, %c0_23, %c0_24] : memref<8x32x32xbf16, #tpu.memory_space<vmem>>, vector<1x32x32xbf16>
    %29 = vector.shape_cast %28 : vector<1x32x32xbf16> to vector<32x32xbf16>
    %cst_25 = arith.constant dense<0.000000e+00> : vector<8x32xf32>
    %30 = tpu.matmul %27, %29, %cst_25 {dimension_numbers = #tpu.dot_dimension_numbers<[1], [0], [0], [1], [0, 0, 1, 1], [], []>} : vector<8x32xbf16>, vector<32x32xbf16>, vector<8x32xf32> -> vector<8x32xf32>
    %c1_26 = arith.constant 1 : index
    %c0_27 = arith.constant 0 : index
    %c0_28 = arith.constant 0 : index
    %31 = vector.load %arg5[%c1_26, %c0_27, %c0_28] : memref<8x1x32xf32, #tpu.memory_space<vmem>>, vector<1x1x32xf32>
    %32 = vector.shape_cast %31 : vector<1x1x32xf32> to vector<1x32xf32>
    %33 = vector.broadcast %32 : vector<1x32xf32> to vector<8x32xf32>
    %34 = arith.addf %30, %33 : vector<8x32xf32>
    %c2 = arith.constant 2 : index
    %c0_29 = arith.constant 0 : index
    %c0_30 = arith.constant 0 : index
    %35 = vector.load %arg2[%c2, %c0_29, %c0_30] : memref<8x64x32xbf16, #tpu.memory_space<vmem>>, vector<1x64x32xbf16>
    %36 = vector.shape_cast %35 : vector<1x64x32xbf16> to vector<64x32xbf16>
    %cst_31 = arith.constant dense<0.000000e+00> : vector<8x32xf32>
    %37 = tpu.matmul %0, %36, %cst_31 {dimension_numbers = #tpu.dot_dimension_numbers<[1], [0], [0], [1], [0, 0, 1, 1], [], []>} : vector<8x64xbf16>, vector<64x32xbf16>, vector<8x32xf32> -> vector<8x32xf32>
    %c2_32 = arith.constant 2 : index
    %c0_33 = arith.constant 0 : index
    %c0_34 = arith.constant 0 : index
    %38 = vector.load %arg3[%c2_32, %c0_33, %c0_34] : memref<8x1x32xf32, #tpu.memory_space<vmem>>, vector<1x1x32xf32>
    %39 = vector.shape_cast %38 : vector<1x1x32xf32> to vector<1x32xf32>
    %40 = vector.broadcast %39 : vector<1x32xf32> to vector<8x32xf32>
    %41 = arith.addf %37, %40 : vector<8x32xf32>
    %cst_35 = arith.constant 0.000000e+00 : f32
    %42 = vector.broadcast %cst_35 : f32 to vector<8x32xf32>
    %43 = arith.maximumf %41, %42 : vector<8x32xf32>
    %44 = arith.truncf %43 : vector<8x32xf32> to vector<8x32xbf16>
    %c2_36 = arith.constant 2 : index
    %c0_37 = arith.constant 0 : index
    %c0_38 = arith.constant 0 : index
    %45 = vector.load %arg4[%c2_36, %c0_37, %c0_38] : memref<8x32x32xbf16, #tpu.memory_space<vmem>>, vector<1x32x32xbf16>
    %46 = vector.shape_cast %45 : vector<1x32x32xbf16> to vector<32x32xbf16>
    %cst_39 = arith.constant dense<0.000000e+00> : vector<8x32xf32>
    %47 = tpu.matmul %44, %46, %cst_39 {dimension_numbers = #tpu.dot_dimension_numbers<[1], [0], [0], [1], [0, 0, 1, 1], [], []>} : vector<8x32xbf16>, vector<32x32xbf16>, vector<8x32xf32> -> vector<8x32xf32>
    %c2_40 = arith.constant 2 : index
    %c0_41 = arith.constant 0 : index
    %c0_42 = arith.constant 0 : index
    %48 = vector.load %arg5[%c2_40, %c0_41, %c0_42] : memref<8x1x32xf32, #tpu.memory_space<vmem>>, vector<1x1x32xf32>
    %49 = vector.shape_cast %48 : vector<1x1x32xf32> to vector<1x32xf32>
    %50 = vector.broadcast %49 : vector<1x32xf32> to vector<8x32xf32>
    %51 = arith.addf %47, %50 : vector<8x32xf32>
    %c3 = arith.constant 3 : index
    %c0_43 = arith.constant 0 : index
    %c0_44 = arith.constant 0 : index
    %52 = vector.load %arg2[%c3, %c0_43, %c0_44] : memref<8x64x32xbf16, #tpu.memory_space<vmem>>, vector<1x64x32xbf16>
    %53 = vector.shape_cast %52 : vector<1x64x32xbf16> to vector<64x32xbf16>
    %cst_45 = arith.constant dense<0.000000e+00> : vector<8x32xf32>
    %54 = tpu.matmul %0, %53, %cst_45 {dimension_numbers = #tpu.dot_dimension_numbers<[1], [0], [0], [1], [0, 0, 1, 1], [], []>} : vector<8x64xbf16>, vector<64x32xbf16>, vector<8x32xf32> -> vector<8x32xf32>
    %c3_46 = arith.constant 3 : index
    %c0_47 = arith.constant 0 : index
    %c0_48 = arith.constant 0 : index
    %55 = vector.load %arg3[%c3_46, %c0_47, %c0_48] : memref<8x1x32xf32, #tpu.memory_space<vmem>>, vector<1x1x32xf32>
    %56 = vector.shape_cast %55 : vector<1x1x32xf32> to vector<1x32xf32>
    %57 = vector.broadcast %56 : vector<1x32xf32> to vector<8x32xf32>
    %58 = arith.addf %54, %57 : vector<8x32xf32>
    %cst_49 = arith.constant 0.000000e+00 : f32
    %59 = vector.broadcast %cst_49 : f32 to vector<8x32xf32>
    %60 = arith.maximumf %58, %59 : vector<8x32xf32>
    %61 = arith.truncf %60 : vector<8x32xf32> to vector<8x32xbf16>
    %c3_50 = arith.constant 3 : index
    %c0_51 = arith.constant 0 : index
    %c0_52 = arith.constant 0 : index
    %62 = vector.load %arg4[%c3_50, %c0_51, %c0_52] : memref<8x32x32xbf16, #tpu.memory_space<vmem>>, vector<1x32x32xbf16>
    %63 = vector.shape_cast %62 : vector<1x32x32xbf16> to vector<32x32xbf16>
    %cst_53 = arith.constant dense<0.000000e+00> : vector<8x32xf32>
    %64 = tpu.matmul %61, %63, %cst_53 {dimension_numbers = #tpu.dot_dimension_numbers<[1], [0], [0], [1], [0, 0, 1, 1], [], []>} : vector<8x32xbf16>, vector<32x32xbf16>, vector<8x32xf32> -> vector<8x32xf32>
    %c3_54 = arith.constant 3 : index
    %c0_55 = arith.constant 0 : index
    %c0_56 = arith.constant 0 : index
    %65 = vector.load %arg5[%c3_54, %c0_55, %c0_56] : memref<8x1x32xf32, #tpu.memory_space<vmem>>, vector<1x1x32xf32>
    %66 = vector.shape_cast %65 : vector<1x1x32xf32> to vector<1x32xf32>
    %67 = vector.broadcast %66 : vector<1x32xf32> to vector<8x32xf32>
    %68 = arith.addf %64, %67 : vector<8x32xf32>
    %c4 = arith.constant 4 : index
    %c0_57 = arith.constant 0 : index
    %c0_58 = arith.constant 0 : index
    %69 = vector.load %arg2[%c4, %c0_57, %c0_58] : memref<8x64x32xbf16, #tpu.memory_space<vmem>>, vector<1x64x32xbf16>
    %70 = vector.shape_cast %69 : vector<1x64x32xbf16> to vector<64x32xbf16>
    %cst_59 = arith.constant dense<0.000000e+00> : vector<8x32xf32>
    %71 = tpu.matmul %0, %70, %cst_59 {dimension_numbers = #tpu.dot_dimension_numbers<[1], [0], [0], [1], [0, 0, 1, 1], [], []>} : vector<8x64xbf16>, vector<64x32xbf16>, vector<8x32xf32> -> vector<8x32xf32>
    %c4_60 = arith.constant 4 : index
    %c0_61 = arith.constant 0 : index
    %c0_62 = arith.constant 0 : index
    %72 = vector.load %arg3[%c4_60, %c0_61, %c0_62] : memref<8x1x32xf32, #tpu.memory_space<vmem>>, vector<1x1x32xf32>
    %73 = vector.shape_cast %72 : vector<1x1x32xf32> to vector<1x32xf32>
    %74 = vector.broadcast %73 : vector<1x32xf32> to vector<8x32xf32>
    %75 = arith.addf %71, %74 : vector<8x32xf32>
    %cst_63 = arith.constant 0.000000e+00 : f32
    %76 = vector.broadcast %cst_63 : f32 to vector<8x32xf32>
    %77 = arith.maximumf %75, %76 : vector<8x32xf32>
    %78 = arith.truncf %77 : vector<8x32xf32> to vector<8x32xbf16>
    %c4_64 = arith.constant 4 : index
    %c0_65 = arith.constant 0 : index
    %c0_66 = arith.constant 0 : index
    %79 = vector.load %arg4[%c4_64, %c0_65, %c0_66] : memref<8x32x32xbf16, #tpu.memory_space<vmem>>, vector<1x32x32xbf16>
    %80 = vector.shape_cast %79 : vector<1x32x32xbf16> to vector<32x32xbf16>
    %cst_67 = arith.constant dense<0.000000e+00> : vector<8x32xf32>
    %81 = tpu.matmul %78, %80, %cst_67 {dimension_numbers = #tpu.dot_dimension_numbers<[1], [0], [0], [1], [0, 0, 1, 1], [], []>} : vector<8x32xbf16>, vector<32x32xbf16>, vector<8x32xf32> -> vector<8x32xf32>
    %c4_68 = arith.constant 4 : index
    %c0_69 = arith.constant 0 : index
    %c0_70 = arith.constant 0 : index
    %82 = vector.load %arg5[%c4_68, %c0_69, %c0_70] : memref<8x1x32xf32, #tpu.memory_space<vmem>>, vector<1x1x32xf32>
    %83 = vector.shape_cast %82 : vector<1x1x32xf32> to vector<1x32xf32>
    %84 = vector.broadcast %83 : vector<1x32xf32> to vector<8x32xf32>
    %85 = arith.addf %81, %84 : vector<8x32xf32>
    %c5 = arith.constant 5 : index
    %c0_71 = arith.constant 0 : index
    %c0_72 = arith.constant 0 : index
    %86 = vector.load %arg2[%c5, %c0_71, %c0_72] : memref<8x64x32xbf16, #tpu.memory_space<vmem>>, vector<1x64x32xbf16>
    %87 = vector.shape_cast %86 : vector<1x64x32xbf16> to vector<64x32xbf16>
    %cst_73 = arith.constant dense<0.000000e+00> : vector<8x32xf32>
    %88 = tpu.matmul %0, %87, %cst_73 {dimension_numbers = #tpu.dot_dimension_numbers<[1], [0], [0], [1], [0, 0, 1, 1], [], []>} : vector<8x64xbf16>, vector<64x32xbf16>, vector<8x32xf32> -> vector<8x32xf32>
    %c5_74 = arith.constant 5 : index
    %c0_75 = arith.constant 0 : index
    %c0_76 = arith.constant 0 : index
    %89 = vector.load %arg3[%c5_74, %c0_75, %c0_76] : memref<8x1x32xf32, #tpu.memory_space<vmem>>, vector<1x1x32xf32>
    %90 = vector.shape_cast %89 : vector<1x1x32xf32> to vector<1x32xf32>
    %91 = vector.broadcast %90 : vector<1x32xf32> to vector<8x32xf32>
    %92 = arith.addf %88, %91 : vector<8x32xf32>
    %cst_77 = arith.constant 0.000000e+00 : f32
    %93 = vector.broadcast %cst_77 : f32 to vector<8x32xf32>
    %94 = arith.maximumf %92, %93 : vector<8x32xf32>
    %95 = arith.truncf %94 : vector<8x32xf32> to vector<8x32xbf16>
    %c5_78 = arith.constant 5 : index
    %c0_79 = arith.constant 0 : index
    %c0_80 = arith.constant 0 : index
    %96 = vector.load %arg4[%c5_78, %c0_79, %c0_80] : memref<8x32x32xbf16, #tpu.memory_space<vmem>>, vector<1x32x32xbf16>
    %97 = vector.shape_cast %96 : vector<1x32x32xbf16> to vector<32x32xbf16>
    %cst_81 = arith.constant dense<0.000000e+00> : vector<8x32xf32>
    %98 = tpu.matmul %95, %97, %cst_81 {dimension_numbers = #tpu.dot_dimension_numbers<[1], [0], [0], [1], [0, 0, 1, 1], [], []>} : vector<8x32xbf16>, vector<32x32xbf16>, vector<8x32xf32> -> vector<8x32xf32>
    %c5_82 = arith.constant 5 : index
    %c0_83 = arith.constant 0 : index
    %c0_84 = arith.constant 0 : index
    %99 = vector.load %arg5[%c5_82, %c0_83, %c0_84] : memref<8x1x32xf32, #tpu.memory_space<vmem>>, vector<1x1x32xf32>
    %100 = vector.shape_cast %99 : vector<1x1x32xf32> to vector<1x32xf32>
    %101 = vector.broadcast %100 : vector<1x32xf32> to vector<8x32xf32>
    %102 = arith.addf %98, %101 : vector<8x32xf32>
    %c6 = arith.constant 6 : index
    %c0_85 = arith.constant 0 : index
    %c0_86 = arith.constant 0 : index
    %103 = vector.load %arg2[%c6, %c0_85, %c0_86] : memref<8x64x32xbf16, #tpu.memory_space<vmem>>, vector<1x64x32xbf16>
    %104 = vector.shape_cast %103 : vector<1x64x32xbf16> to vector<64x32xbf16>
    %cst_87 = arith.constant dense<0.000000e+00> : vector<8x32xf32>
    %105 = tpu.matmul %0, %104, %cst_87 {dimension_numbers = #tpu.dot_dimension_numbers<[1], [0], [0], [1], [0, 0, 1, 1], [], []>} : vector<8x64xbf16>, vector<64x32xbf16>, vector<8x32xf32> -> vector<8x32xf32>
    %c6_88 = arith.constant 6 : index
    %c0_89 = arith.constant 0 : index
    %c0_90 = arith.constant 0 : index
    %106 = vector.load %arg3[%c6_88, %c0_89, %c0_90] : memref<8x1x32xf32, #tpu.memory_space<vmem>>, vector<1x1x32xf32>
    %107 = vector.shape_cast %106 : vector<1x1x32xf32> to vector<1x32xf32>
    %108 = vector.broadcast %107 : vector<1x32xf32> to vector<8x32xf32>
    %109 = arith.addf %105, %108 : vector<8x32xf32>
    %cst_91 = arith.constant 0.000000e+00 : f32
    %110 = vector.broadcast %cst_91 : f32 to vector<8x32xf32>
    %111 = arith.maximumf %109, %110 : vector<8x32xf32>
    %112 = arith.truncf %111 : vector<8x32xf32> to vector<8x32xbf16>
    %c6_92 = arith.constant 6 : index
    %c0_93 = arith.constant 0 : index
    %c0_94 = arith.constant 0 : index
    %113 = vector.load %arg4[%c6_92, %c0_93, %c0_94] : memref<8x32x32xbf16, #tpu.memory_space<vmem>>, vector<1x32x32xbf16>
    %114 = vector.shape_cast %113 : vector<1x32x32xbf16> to vector<32x32xbf16>
    %cst_95 = arith.constant dense<0.000000e+00> : vector<8x32xf32>
    %115 = tpu.matmul %112, %114, %cst_95 {dimension_numbers = #tpu.dot_dimension_numbers<[1], [0], [0], [1], [0, 0, 1, 1], [], []>} : vector<8x32xbf16>, vector<32x32xbf16>, vector<8x32xf32> -> vector<8x32xf32>
    %c6_96 = arith.constant 6 : index
    %c0_97 = arith.constant 0 : index
    %c0_98 = arith.constant 0 : index
    %116 = vector.load %arg5[%c6_96, %c0_97, %c0_98] : memref<8x1x32xf32, #tpu.memory_space<vmem>>, vector<1x1x32xf32>
    %117 = vector.shape_cast %116 : vector<1x1x32xf32> to vector<1x32xf32>
    %118 = vector.broadcast %117 : vector<1x32xf32> to vector<8x32xf32>
    %119 = arith.addf %115, %118 : vector<8x32xf32>
    %c7 = arith.constant 7 : index
    %c0_99 = arith.constant 0 : index
    %c0_100 = arith.constant 0 : index
    %120 = vector.load %arg2[%c7, %c0_99, %c0_100] : memref<8x64x32xbf16, #tpu.memory_space<vmem>>, vector<1x64x32xbf16>
    %121 = vector.shape_cast %120 : vector<1x64x32xbf16> to vector<64x32xbf16>
    %cst_101 = arith.constant dense<0.000000e+00> : vector<8x32xf32>
    %122 = tpu.matmul %0, %121, %cst_101 {dimension_numbers = #tpu.dot_dimension_numbers<[1], [0], [0], [1], [0, 0, 1, 1], [], []>} : vector<8x64xbf16>, vector<64x32xbf16>, vector<8x32xf32> -> vector<8x32xf32>
    %c7_102 = arith.constant 7 : index
    %c0_103 = arith.constant 0 : index
    %c0_104 = arith.constant 0 : index
    %123 = vector.load %arg3[%c7_102, %c0_103, %c0_104] : memref<8x1x32xf32, #tpu.memory_space<vmem>>, vector<1x1x32xf32>
    %124 = vector.shape_cast %123 : vector<1x1x32xf32> to vector<1x32xf32>
    %125 = vector.broadcast %124 : vector<1x32xf32> to vector<8x32xf32>
    %126 = arith.addf %122, %125 : vector<8x32xf32>
    %cst_105 = arith.constant 0.000000e+00 : f32
    %127 = vector.broadcast %cst_105 : f32 to vector<8x32xf32>
    %128 = arith.maximumf %126, %127 : vector<8x32xf32>
    %129 = arith.truncf %128 : vector<8x32xf32> to vector<8x32xbf16>
    %c7_106 = arith.constant 7 : index
    %c0_107 = arith.constant 0 : index
    %c0_108 = arith.constant 0 : index
    %130 = vector.load %arg4[%c7_106, %c0_107, %c0_108] : memref<8x32x32xbf16, #tpu.memory_space<vmem>>, vector<1x32x32xbf16>
    %131 = vector.shape_cast %130 : vector<1x32x32xbf16> to vector<32x32xbf16>
    %cst_109 = arith.constant dense<0.000000e+00> : vector<8x32xf32>
    %132 = tpu.matmul %129, %131, %cst_109 {dimension_numbers = #tpu.dot_dimension_numbers<[1], [0], [0], [1], [0, 0, 1, 1], [], []>} : vector<8x32xbf16>, vector<32x32xbf16>, vector<8x32xf32> -> vector<8x32xf32>
    %c7_110 = arith.constant 7 : index
    %c0_111 = arith.constant 0 : index
    %c0_112 = arith.constant 0 : index
    %133 = vector.load %arg5[%c7_110, %c0_111, %c0_112] : memref<8x1x32xf32, #tpu.memory_space<vmem>>, vector<1x1x32xf32>
    %134 = vector.shape_cast %133 : vector<1x1x32xf32> to vector<1x32xf32>
    %135 = vector.broadcast %134 : vector<1x32xf32> to vector<8x32xf32>
    %136 = arith.addf %132, %135 : vector<8x32xf32>
    %137 = tpu.iota {dimensions = array<i32: 1>} : vector<8x8xi32>
    %c0_113 = arith.constant 0 : index
    %c0_114 = arith.constant 0 : index
    %c0_115 = arith.constant 0 : index
    %138 = vector.load %arg6[%c0_113, %c0_114, %c0_115] : memref<3x64x8xbf16, #tpu.memory_space<vmem>>, vector<1x64x8xbf16>
    %139 = vector.shape_cast %138 : vector<1x64x8xbf16> to vector<64x8xbf16>
    %cst_116 = arith.constant dense<0.000000e+00> : vector<8x8xf32>
    %140 = tpu.matmul %0, %139, %cst_116 {dimension_numbers = #tpu.dot_dimension_numbers<[1], [0], [0], [1], [0, 0, 1, 1], [], []>} : vector<8x64xbf16>, vector<64x8xbf16>, vector<8x8xf32> -> vector<8x8xf32>
    %c0_117 = arith.constant 0 : index
    %c0_118 = arith.constant 0 : index
    %c0_119 = arith.constant 0 : index
    %141 = vector.load %arg7[%c0_117, %c0_118, %c0_119] : memref<3x1x8xf32, #tpu.memory_space<vmem>>, vector<1x1x8xf32>
    %142 = vector.shape_cast %141 : vector<1x1x8xf32> to vector<1x8xf32>
    %143 = vector.broadcast %142 : vector<1x8xf32> to vector<8x8xf32>
    %144 = arith.addf %140, %143 : vector<8x8xf32>
    %cst_120 = arith.constant dense<0xFF800000> : vector<8xf32>
    %145 = vector.multi_reduction <maximumf>, %144, %cst_120 [1] : vector<8x8xf32> to vector<8xf32>
    %146 = vector.shape_cast %145 : vector<8xf32> to vector<8x1xf32>
    %147 = vector.broadcast %146 : vector<8x1xf32> to vector<8x8xf32>
    %148 = arith.cmpf oeq, %144, %147 : vector<8x8xf32>
    %c8_i32 = arith.constant 8 : i32
    %149 = vector.broadcast %c8_i32 : i32 to vector<8x8xi32>
    %150 = arith.select %148, %137, %149 : vector<8x8xi1>, vector<8x8xi32>
    %cst_121 = arith.constant dense<2147483647> : vector<8xi32>
    %151 = vector.multi_reduction <minsi>, %150, %cst_121 [1] : vector<8x8xi32> to vector<8xi32>
    %152 = vector.shape_cast %151 : vector<8xi32> to vector<8x1xi32>
    %153 = vector.broadcast %152 : vector<8x1xi32> to vector<8x8xi32>
    %154 = arith.cmpi eq, %137, %153 : vector<8x8xi32>
    %cst_122 = arith.constant -1.000000e+30 : f32
    %155 = vector.broadcast %cst_122 : f32 to vector<8x8xf32>
    %156 = arith.select %154, %155, %144 : vector<8x8xi1>, vector<8x8xf32>
    %cst_123 = arith.constant dense<0xFF800000> : vector<8xf32>
    %157 = vector.multi_reduction <maximumf>, %156, %cst_123 [1] : vector<8x8xf32> to vector<8xf32>
    %158 = vector.shape_cast %157 : vector<8xf32> to vector<8x1xf32>
    %159 = vector.broadcast %158 : vector<8x1xf32> to vector<8x8xf32>
    %160 = arith.cmpf oeq, %156, %159 : vector<8x8xf32>
    %c8_i32_124 = arith.constant 8 : i32
    %161 = vector.broadcast %c8_i32_124 : i32 to vector<8x8xi32>
    %162 = arith.select %160, %137, %161 : vector<8x8xi1>, vector<8x8xi32>
    %cst_125 = arith.constant dense<2147483647> : vector<8xi32>
    %163 = vector.multi_reduction <minsi>, %162, %cst_125 [1] : vector<8x8xi32> to vector<8xi32>
    %164 = vector.shape_cast %163 : vector<8xi32> to vector<8x1xi32>
    %165 = vector.broadcast %164 : vector<8x1xi32> to vector<8x8xi32>
    %166 = arith.cmpi eq, %137, %165 : vector<8x8xi32>
    %167 = arith.subf %146, %146 : vector<8x1xf32>
    %168 = math.exp %167 : vector<8x1xf32>
    %169 = arith.subf %158, %146 : vector<8x1xf32>
    %170 = math.exp %169 : vector<8x1xf32>
    %171 = arith.addf %168, %170 : vector<8x1xf32>
    %172 = tpu.reciprocal %171 {approx = true} : vector<8x1xf32> -> vector<8x1xf32>
    %cst_126 = arith.constant 0.000000e+00 : f32
    %173 = vector.broadcast %cst_126 : f32 to vector<8x8xf32>
    %174 = arith.extui %154 : vector<8x8xi1> to vector<8x8xi32>
    %175 = arith.sitofp %174 : vector<8x8xi32> to vector<8x8xf32>
    %176 = arith.mulf %168, %172 : vector<8x1xf32>
    %177 = vector.broadcast %176 : vector<8x1xf32> to vector<8x8xf32>
    %178 = arith.mulf %175, %177 : vector<8x8xf32>
    %179 = arith.addf %173, %178 : vector<8x8xf32>
    %180 = arith.extui %166 : vector<8x8xi1> to vector<8x8xi32>
    %181 = arith.sitofp %180 : vector<8x8xi32> to vector<8x8xf32>
    %182 = arith.mulf %170, %172 : vector<8x1xf32>
    %183 = vector.broadcast %182 : vector<8x1xf32> to vector<8x8xf32>
    %184 = arith.mulf %181, %183 : vector<8x8xf32>
    %185 = arith.addf %179, %184 : vector<8x8xf32>
    %cst_127 = arith.constant 0.000000e+00 : f32
    %186 = vector.broadcast %cst_127 : f32 to vector<8x32xf32>
    %187 = vector.extract_strided_slice %185 {offsets = [0, 0], sizes = [8, 1], strides = [1, 1]} : vector<8x8xf32> to vector<8x1xf32>
    %188 = vector.broadcast %187 : vector<8x1xf32> to vector<8x32xf32>
    %189 = arith.mulf %188, %17 : vector<8x32xf32>
    %190 = arith.addf %186, %189 : vector<8x32xf32>
    %191 = vector.extract_strided_slice %185 {offsets = [0, 1], sizes = [8, 1], strides = [1, 1]} : vector<8x8xf32> to vector<8x1xf32>
    %192 = vector.broadcast %191 : vector<8x1xf32> to vector<8x32xf32>
    %193 = arith.mulf %192, %34 : vector<8x32xf32>
    %194 = arith.addf %190, %193 : vector<8x32xf32>
    %195 = vector.extract_strided_slice %185 {offsets = [0, 2], sizes = [8, 1], strides = [1, 1]} : vector<8x8xf32> to vector<8x1xf32>
    %196 = vector.broadcast %195 : vector<8x1xf32> to vector<8x32xf32>
    %197 = arith.mulf %196, %51 : vector<8x32xf32>
    %198 = arith.addf %194, %197 : vector<8x32xf32>
    %199 = vector.extract_strided_slice %185 {offsets = [0, 3], sizes = [8, 1], strides = [1, 1]} : vector<8x8xf32> to vector<8x1xf32>
    %200 = vector.broadcast %199 : vector<8x1xf32> to vector<8x32xf32>
    %201 = arith.mulf %200, %68 : vector<8x32xf32>
    %202 = arith.addf %198, %201 : vector<8x32xf32>
    %203 = vector.extract_strided_slice %185 {offsets = [0, 4], sizes = [8, 1], strides = [1, 1]} : vector<8x8xf32> to vector<8x1xf32>
    %204 = vector.broadcast %203 : vector<8x1xf32> to vector<8x32xf32>
    %205 = arith.mulf %204, %85 : vector<8x32xf32>
    %206 = arith.addf %202, %205 : vector<8x32xf32>
    %207 = vector.extract_strided_slice %185 {offsets = [0, 5], sizes = [8, 1], strides = [1, 1]} : vector<8x8xf32> to vector<8x1xf32>
    %208 = vector.broadcast %207 : vector<8x1xf32> to vector<8x32xf32>
    %209 = arith.mulf %208, %102 : vector<8x32xf32>
    %210 = arith.addf %206, %209 : vector<8x32xf32>
    %211 = vector.extract_strided_slice %185 {offsets = [0, 6], sizes = [8, 1], strides = [1, 1]} : vector<8x8xf32> to vector<8x1xf32>
    %212 = vector.broadcast %211 : vector<8x1xf32> to vector<8x32xf32>
    %213 = arith.mulf %212, %119 : vector<8x32xf32>
    %214 = arith.addf %210, %213 : vector<8x32xf32>
    %215 = vector.extract_strided_slice %185 {offsets = [0, 7], sizes = [8, 1], strides = [1, 1]} : vector<8x8xf32> to vector<8x1xf32>
    %216 = vector.broadcast %215 : vector<8x1xf32> to vector<8x32xf32>
    %217 = arith.mulf %216, %136 : vector<8x32xf32>
    %218 = arith.addf %214, %217 : vector<8x32xf32>
    %c1_128 = arith.constant 1 : index
    %c0_129 = arith.constant 0 : index
    %c0_130 = arith.constant 0 : index
    %219 = vector.load %arg6[%c1_128, %c0_129, %c0_130] : memref<3x64x8xbf16, #tpu.memory_space<vmem>>, vector<1x64x8xbf16>
    %220 = vector.shape_cast %219 : vector<1x64x8xbf16> to vector<64x8xbf16>
    %cst_131 = arith.constant dense<0.000000e+00> : vector<8x8xf32>
    %221 = tpu.matmul %0, %220, %cst_131 {dimension_numbers = #tpu.dot_dimension_numbers<[1], [0], [0], [1], [0, 0, 1, 1], [], []>} : vector<8x64xbf16>, vector<64x8xbf16>, vector<8x8xf32> -> vector<8x8xf32>
    %c1_132 = arith.constant 1 : index
    %c0_133 = arith.constant 0 : index
    %c0_134 = arith.constant 0 : index
    %222 = vector.load %arg7[%c1_132, %c0_133, %c0_134] : memref<3x1x8xf32, #tpu.memory_space<vmem>>, vector<1x1x8xf32>
    %223 = vector.shape_cast %222 : vector<1x1x8xf32> to vector<1x8xf32>
    %224 = vector.broadcast %223 : vector<1x8xf32> to vector<8x8xf32>
    %225 = arith.addf %221, %224 : vector<8x8xf32>
    %cst_135 = arith.constant dense<0xFF800000> : vector<8xf32>
    %226 = vector.multi_reduction <maximumf>, %225, %cst_135 [1] : vector<8x8xf32> to vector<8xf32>
    %227 = vector.shape_cast %226 : vector<8xf32> to vector<8x1xf32>
    %228 = vector.broadcast %227 : vector<8x1xf32> to vector<8x8xf32>
    %229 = arith.cmpf oeq, %225, %228 : vector<8x8xf32>
    %c8_i32_136 = arith.constant 8 : i32
    %230 = vector.broadcast %c8_i32_136 : i32 to vector<8x8xi32>
    %231 = arith.select %229, %137, %230 : vector<8x8xi1>, vector<8x8xi32>
    %cst_137 = arith.constant dense<2147483647> : vector<8xi32>
    %232 = vector.multi_reduction <minsi>, %231, %cst_137 [1] : vector<8x8xi32> to vector<8xi32>
    %233 = vector.shape_cast %232 : vector<8xi32> to vector<8x1xi32>
    %234 = vector.broadcast %233 : vector<8x1xi32> to vector<8x8xi32>
    %235 = arith.cmpi eq, %137, %234 : vector<8x8xi32>
    %cst_138 = arith.constant -1.000000e+30 : f32
    %236 = vector.broadcast %cst_138 : f32 to vector<8x8xf32>
    %237 = arith.select %235, %236, %225 : vector<8x8xi1>, vector<8x8xf32>
    %cst_139 = arith.constant dense<0xFF800000> : vector<8xf32>
    %238 = vector.multi_reduction <maximumf>, %237, %cst_139 [1] : vector<8x8xf32> to vector<8xf32>
    %239 = vector.shape_cast %238 : vector<8xf32> to vector<8x1xf32>
    %240 = vector.broadcast %239 : vector<8x1xf32> to vector<8x8xf32>
    %241 = arith.cmpf oeq, %237, %240 : vector<8x8xf32>
    %c8_i32_140 = arith.constant 8 : i32
    %242 = vector.broadcast %c8_i32_140 : i32 to vector<8x8xi32>
    %243 = arith.select %241, %137, %242 : vector<8x8xi1>, vector<8x8xi32>
    %cst_141 = arith.constant dense<2147483647> : vector<8xi32>
    %244 = vector.multi_reduction <minsi>, %243, %cst_141 [1] : vector<8x8xi32> to vector<8xi32>
    %245 = vector.shape_cast %244 : vector<8xi32> to vector<8x1xi32>
    %246 = vector.broadcast %245 : vector<8x1xi32> to vector<8x8xi32>
    %247 = arith.cmpi eq, %137, %246 : vector<8x8xi32>
    %248 = arith.subf %227, %227 : vector<8x1xf32>
    %249 = math.exp %248 : vector<8x1xf32>
    %250 = arith.subf %239, %227 : vector<8x1xf32>
    %251 = math.exp %250 : vector<8x1xf32>
    %252 = arith.addf %249, %251 : vector<8x1xf32>
    %253 = tpu.reciprocal %252 {approx = true} : vector<8x1xf32> -> vector<8x1xf32>
    %cst_142 = arith.constant 0.000000e+00 : f32
    %254 = vector.broadcast %cst_142 : f32 to vector<8x8xf32>
    %255 = arith.extui %235 : vector<8x8xi1> to vector<8x8xi32>
    %256 = arith.sitofp %255 : vector<8x8xi32> to vector<8x8xf32>
    %257 = arith.mulf %249, %253 : vector<8x1xf32>
    %258 = vector.broadcast %257 : vector<8x1xf32> to vector<8x8xf32>
    %259 = arith.mulf %256, %258 : vector<8x8xf32>
    %260 = arith.addf %254, %259 : vector<8x8xf32>
    %261 = arith.extui %247 : vector<8x8xi1> to vector<8x8xi32>
    %262 = arith.sitofp %261 : vector<8x8xi32> to vector<8x8xf32>
    %263 = arith.mulf %251, %253 : vector<8x1xf32>
    %264 = vector.broadcast %263 : vector<8x1xf32> to vector<8x8xf32>
    %265 = arith.mulf %262, %264 : vector<8x8xf32>
    %266 = arith.addf %260, %265 : vector<8x8xf32>
    %cst_143 = arith.constant 0.000000e+00 : f32
    %267 = vector.broadcast %cst_143 : f32 to vector<8x32xf32>
    %268 = vector.extract_strided_slice %266 {offsets = [0, 0], sizes = [8, 1], strides = [1, 1]} : vector<8x8xf32> to vector<8x1xf32>
    %269 = vector.broadcast %268 : vector<8x1xf32> to vector<8x32xf32>
    %270 = arith.mulf %269, %17 : vector<8x32xf32>
    %271 = arith.addf %267, %270 : vector<8x32xf32>
    %272 = vector.extract_strided_slice %266 {offsets = [0, 1], sizes = [8, 1], strides = [1, 1]} : vector<8x8xf32> to vector<8x1xf32>
    %273 = vector.broadcast %272 : vector<8x1xf32> to vector<8x32xf32>
    %274 = arith.mulf %273, %34 : vector<8x32xf32>
    %275 = arith.addf %271, %274 : vector<8x32xf32>
    %276 = vector.extract_strided_slice %266 {offsets = [0, 2], sizes = [8, 1], strides = [1, 1]} : vector<8x8xf32> to vector<8x1xf32>
    %277 = vector.broadcast %276 : vector<8x1xf32> to vector<8x32xf32>
    %278 = arith.mulf %277, %51 : vector<8x32xf32>
    %279 = arith.addf %275, %278 : vector<8x32xf32>
    %280 = vector.extract_strided_slice %266 {offsets = [0, 3], sizes = [8, 1], strides = [1, 1]} : vector<8x8xf32> to vector<8x1xf32>
    %281 = vector.broadcast %280 : vector<8x1xf32> to vector<8x32xf32>
    %282 = arith.mulf %281, %68 : vector<8x32xf32>
    %283 = arith.addf %279, %282 : vector<8x32xf32>
    %284 = vector.extract_strided_slice %266 {offsets = [0, 4], sizes = [8, 1], strides = [1, 1]} : vector<8x8xf32> to vector<8x1xf32>
    %285 = vector.broadcast %284 : vector<8x1xf32> to vector<8x32xf32>
    %286 = arith.mulf %285, %85 : vector<8x32xf32>
    %287 = arith.addf %283, %286 : vector<8x32xf32>
    %288 = vector.extract_strided_slice %266 {offsets = [0, 5], sizes = [8, 1], strides = [1, 1]} : vector<8x8xf32> to vector<8x1xf32>
    %289 = vector.broadcast %288 : vector<8x1xf32> to vector<8x32xf32>
    %290 = arith.mulf %289, %102 : vector<8x32xf32>
    %291 = arith.addf %287, %290 : vector<8x32xf32>
    %292 = vector.extract_strided_slice %266 {offsets = [0, 6], sizes = [8, 1], strides = [1, 1]} : vector<8x8xf32> to vector<8x1xf32>
    %293 = vector.broadcast %292 : vector<8x1xf32> to vector<8x32xf32>
    %294 = arith.mulf %293, %119 : vector<8x32xf32>
    %295 = arith.addf %291, %294 : vector<8x32xf32>
    %296 = vector.extract_strided_slice %266 {offsets = [0, 7], sizes = [8, 1], strides = [1, 1]} : vector<8x8xf32> to vector<8x1xf32>
    %297 = vector.broadcast %296 : vector<8x1xf32> to vector<8x32xf32>
    %298 = arith.mulf %297, %136 : vector<8x32xf32>
    %299 = arith.addf %295, %298 : vector<8x32xf32>
    %c2_144 = arith.constant 2 : index
    %c0_145 = arith.constant 0 : index
    %c0_146 = arith.constant 0 : index
    %300 = vector.load %arg6[%c2_144, %c0_145, %c0_146] : memref<3x64x8xbf16, #tpu.memory_space<vmem>>, vector<1x64x8xbf16>
    %301 = vector.shape_cast %300 : vector<1x64x8xbf16> to vector<64x8xbf16>
    %cst_147 = arith.constant dense<0.000000e+00> : vector<8x8xf32>
    %302 = tpu.matmul %0, %301, %cst_147 {dimension_numbers = #tpu.dot_dimension_numbers<[1], [0], [0], [1], [0, 0, 1, 1], [], []>} : vector<8x64xbf16>, vector<64x8xbf16>, vector<8x8xf32> -> vector<8x8xf32>
    %c2_148 = arith.constant 2 : index
    %c0_149 = arith.constant 0 : index
    %c0_150 = arith.constant 0 : index
    %303 = vector.load %arg7[%c2_148, %c0_149, %c0_150] : memref<3x1x8xf32, #tpu.memory_space<vmem>>, vector<1x1x8xf32>
    %304 = vector.shape_cast %303 : vector<1x1x8xf32> to vector<1x8xf32>
    %305 = vector.broadcast %304 : vector<1x8xf32> to vector<8x8xf32>
    %306 = arith.addf %302, %305 : vector<8x8xf32>
    %cst_151 = arith.constant dense<0xFF800000> : vector<8xf32>
    %307 = vector.multi_reduction <maximumf>, %306, %cst_151 [1] : vector<8x8xf32> to vector<8xf32>
    %308 = vector.shape_cast %307 : vector<8xf32> to vector<8x1xf32>
    %309 = vector.broadcast %308 : vector<8x1xf32> to vector<8x8xf32>
    %310 = arith.cmpf oeq, %306, %309 : vector<8x8xf32>
    %c8_i32_152 = arith.constant 8 : i32
    %311 = vector.broadcast %c8_i32_152 : i32 to vector<8x8xi32>
    %312 = arith.select %310, %137, %311 : vector<8x8xi1>, vector<8x8xi32>
    %cst_153 = arith.constant dense<2147483647> : vector<8xi32>
    %313 = vector.multi_reduction <minsi>, %312, %cst_153 [1] : vector<8x8xi32> to vector<8xi32>
    %314 = vector.shape_cast %313 : vector<8xi32> to vector<8x1xi32>
    %315 = vector.broadcast %314 : vector<8x1xi32> to vector<8x8xi32>
    %316 = arith.cmpi eq, %137, %315 : vector<8x8xi32>
    %cst_154 = arith.constant -1.000000e+30 : f32
    %317 = vector.broadcast %cst_154 : f32 to vector<8x8xf32>
    %318 = arith.select %316, %317, %306 : vector<8x8xi1>, vector<8x8xf32>
    %cst_155 = arith.constant dense<0xFF800000> : vector<8xf32>
    %319 = vector.multi_reduction <maximumf>, %318, %cst_155 [1] : vector<8x8xf32> to vector<8xf32>
    %320 = vector.shape_cast %319 : vector<8xf32> to vector<8x1xf32>
    %321 = vector.broadcast %320 : vector<8x1xf32> to vector<8x8xf32>
    %322 = arith.cmpf oeq, %318, %321 : vector<8x8xf32>
    %c8_i32_156 = arith.constant 8 : i32
    %323 = vector.broadcast %c8_i32_156 : i32 to vector<8x8xi32>
    %324 = arith.select %322, %137, %323 : vector<8x8xi1>, vector<8x8xi32>
    %cst_157 = arith.constant dense<2147483647> : vector<8xi32>
    %325 = vector.multi_reduction <minsi>, %324, %cst_157 [1] : vector<8x8xi32> to vector<8xi32>
    %326 = vector.shape_cast %325 : vector<8xi32> to vector<8x1xi32>
    %327 = vector.broadcast %326 : vector<8x1xi32> to vector<8x8xi32>
    %328 = arith.cmpi eq, %137, %327 : vector<8x8xi32>
    %329 = arith.subf %308, %308 : vector<8x1xf32>
    %330 = math.exp %329 : vector<8x1xf32>
    %331 = arith.subf %320, %308 : vector<8x1xf32>
    %332 = math.exp %331 : vector<8x1xf32>
    %333 = arith.addf %330, %332 : vector<8x1xf32>
    %334 = tpu.reciprocal %333 {approx = true} : vector<8x1xf32> -> vector<8x1xf32>
    %cst_158 = arith.constant 0.000000e+00 : f32
    %335 = vector.broadcast %cst_158 : f32 to vector<8x8xf32>
    %336 = arith.extui %316 : vector<8x8xi1> to vector<8x8xi32>
    %337 = arith.sitofp %336 : vector<8x8xi32> to vector<8x8xf32>
    %338 = arith.mulf %330, %334 : vector<8x1xf32>
    %339 = vector.broadcast %338 : vector<8x1xf32> to vector<8x8xf32>
    %340 = arith.mulf %337, %339 : vector<8x8xf32>
    %341 = arith.addf %335, %340 : vector<8x8xf32>
    %342 = arith.extui %328 : vector<8x8xi1> to vector<8x8xi32>
    %343 = arith.sitofp %342 : vector<8x8xi32> to vector<8x8xf32>
    %344 = arith.mulf %332, %334 : vector<8x1xf32>
    %345 = vector.broadcast %344 : vector<8x1xf32> to vector<8x8xf32>
    %346 = arith.mulf %343, %345 : vector<8x8xf32>
    %347 = arith.addf %341, %346 : vector<8x8xf32>
    %cst_159 = arith.constant 0.000000e+00 : f32
    %348 = vector.broadcast %cst_159 : f32 to vector<8x32xf32>
    %349 = vector.extract_strided_slice %347 {offsets = [0, 0], sizes = [8, 1], strides = [1, 1]} : vector<8x8xf32> to vector<8x1xf32>
    %350 = vector.broadcast %349 : vector<8x1xf32> to vector<8x32xf32>
    %351 = arith.mulf %350, %17 : vector<8x32xf32>
    %352 = arith.addf %348, %351 : vector<8x32xf32>
    %353 = vector.extract_strided_slice %347 {offsets = [0, 1], sizes = [8, 1], strides = [1, 1]} : vector<8x8xf32> to vector<8x1xf32>
    %354 = vector.broadcast %353 : vector<8x1xf32> to vector<8x32xf32>
    %355 = arith.mulf %354, %34 : vector<8x32xf32>
    %356 = arith.addf %352, %355 : vector<8x32xf32>
    %357 = vector.extract_strided_slice %347 {offsets = [0, 2], sizes = [8, 1], strides = [1, 1]} : vector<8x8xf32> to vector<8x1xf32>
    %358 = vector.broadcast %357 : vector<8x1xf32> to vector<8x32xf32>
    %359 = arith.mulf %358, %51 : vector<8x32xf32>
    %360 = arith.addf %356, %359 : vector<8x32xf32>
    %361 = vector.extract_strided_slice %347 {offsets = [0, 3], sizes = [8, 1], strides = [1, 1]} : vector<8x8xf32> to vector<8x1xf32>
    %362 = vector.broadcast %361 : vector<8x1xf32> to vector<8x32xf32>
    %363 = arith.mulf %362, %68 : vector<8x32xf32>
    %364 = arith.addf %360, %363 : vector<8x32xf32>
    %365 = vector.extract_strided_slice %347 {offsets = [0, 4], sizes = [8, 1], strides = [1, 1]} : vector<8x8xf32> to vector<8x1xf32>
    %366 = vector.broadcast %365 : vector<8x1xf32> to vector<8x32xf32>
    %367 = arith.mulf %366, %85 : vector<8x32xf32>
    %368 = arith.addf %364, %367 : vector<8x32xf32>
    %369 = vector.extract_strided_slice %347 {offsets = [0, 5], sizes = [8, 1], strides = [1, 1]} : vector<8x8xf32> to vector<8x1xf32>
    %370 = vector.broadcast %369 : vector<8x1xf32> to vector<8x32xf32>
    %371 = arith.mulf %370, %102 : vector<8x32xf32>
    %372 = arith.addf %368, %371 : vector<8x32xf32>
    %373 = vector.extract_strided_slice %347 {offsets = [0, 6], sizes = [8, 1], strides = [1, 1]} : vector<8x8xf32> to vector<8x1xf32>
    %374 = vector.broadcast %373 : vector<8x1xf32> to vector<8x32xf32>
    %375 = arith.mulf %374, %119 : vector<8x32xf32>
    %376 = arith.addf %372, %375 : vector<8x32xf32>
    %377 = vector.extract_strided_slice %347 {offsets = [0, 7], sizes = [8, 1], strides = [1, 1]} : vector<8x8xf32> to vector<8x1xf32>
    %378 = vector.broadcast %377 : vector<8x1xf32> to vector<8x32xf32>
    %379 = arith.mulf %378, %136 : vector<8x32xf32>
    %380 = arith.addf %376, %379 : vector<8x32xf32>
    %381 = tpu.concatenate %218, %299, %380 in 1 : vector<8x32xf32>, vector<8x32xf32>, vector<8x32xf32> -> vector<8x96xf32>
    %cst_160 = arith.constant 0.000000e+00 : f32
    %382 = vector.broadcast %cst_160 : f32 to vector<8x32xf32>
    %383 = tpu.concatenate %381, %382 in 1 : vector<8x96xf32>, vector<8x32xf32> -> vector<8x128xf32>
    %c0_161 = arith.constant 0 : index
    %c0_162 = arith.constant 0 : index
    %384 = vector.load %arg8[%c0_161, %c0_162] : memref<8x128xf32, #tpu.memory_space<vmem>>, vector<8x128xf32>
    tpu.vector_store %arg8[%c0_161, %c0_162], %383 {strides = array<i32>} : memref<8x128xf32, #tpu.memory_space<vmem>>, vector<8x128xf32>,
    return
  }
  func.func @transform_0(%arg0: i32) -> (i32, i32) {
    %c0_i32 = arith.constant 0 : i32
    %c0_i32_0 = arith.constant 0 : i32
    return %arg0, %c0_i32 : i32, i32
  }
  func.func @transform_1(%arg0: i32) -> (i32, i32, i32) {
    %c0_i32 = arith.constant 0 : i32
    %c0_i32_0 = arith.constant 0 : i32
    %c0_i32_1 = arith.constant 0 : i32
    %c0_i32_2 = arith.constant 0 : i32
    return %c0_i32, %c0_i32_0, %c0_i32_1 : i32, i32, i32
  }
  func.func @transform_2(%arg0: i32) -> (i32, i32, i32) {
    %c0_i32 = arith.constant 0 : i32
    %c0_i32_0 = arith.constant 0 : i32
    %c0_i32_1 = arith.constant 0 : i32
    %c0_i32_2 = arith.constant 0 : i32
    return %c0_i32, %c0_i32_0, %c0_i32_1 : i32, i32, i32
  }
  func.func @transform_3(%arg0: i32) -> (i32, i32, i32) {
    %c0_i32 = arith.constant 0 : i32
    %c0_i32_0 = arith.constant 0 : i32
    %c0_i32_1 = arith.constant 0 : i32
    %c0_i32_2 = arith.constant 0 : i32
    return %c0_i32, %c0_i32_0, %c0_i32_1 : i32, i32, i32
  }
  func.func @transform_4(%arg0: i32) -> (i32, i32, i32) {
    %c0_i32 = arith.constant 0 : i32
    %c0_i32_0 = arith.constant 0 : i32
    %c0_i32_1 = arith.constant 0 : i32
    %c0_i32_2 = arith.constant 0 : i32
    return %c0_i32, %c0_i32_0, %c0_i32_1 : i32, i32, i32
  }
  func.func @transform_5(%arg0: i32) -> (i32, i32, i32) {
    %c0_i32 = arith.constant 0 : i32
    %c0_i32_0 = arith.constant 0 : i32
    %c0_i32_1 = arith.constant 0 : i32
    %c0_i32_2 = arith.constant 0 : i32
    return %c0_i32, %c0_i32_0, %c0_i32_1 : i32, i32, i32
  }
  func.func @transform_6(%arg0: i32) -> (i32, i32, i32) {
    %c0_i32 = arith.constant 0 : i32
    %c0_i32_0 = arith.constant 0 : i32
    %c0_i32_1 = arith.constant 0 : i32
    %c0_i32_2 = arith.constant 0 : i32
    return %c0_i32, %c0_i32_0, %c0_i32_1 : i32, i32, i32
  }
  func.func @transform_7(%arg0: i32) -> (i32, i32) {
    %c0_i32 = arith.constant 0 : i32
    %c0_i32_0 = arith.constant 0 : i32
    return %arg0, %c0_i32 : i32, i32
  }
}

</mosaic_0001>

<llo_original>
// kernel: tpu_custom_call.1
$region0: #{tpu_custom_call.1}
  #allocation0 [shape = 'u32[]', space=smem, size = 0x4, offset = 0x4, fixed_abs, tag = 'smem constant byte address 0x4 - core index']
  #allocation1 [shape = 'u32[144,128]{1,0:T(1,128)}', space=vmem, size = 0x12000, scoped, tag = 'internal scratch']
  %s0 = inlined_call_operand.vmem [shape: bf16[8,64], index: 0, kind: input, shape index: {}]
  %s1 = inlined_call_operand.vmem [shape: bf16[8,64,32], index: 1, kind: input, shape index: {}]
  %s2 = inlined_call_operand.vmem [shape: f32[8,1,32], index: 2, kind: input, shape index: {}]
  %s3 = inlined_call_operand.vmem [shape: bf16[8,32,32], index: 3, kind: input, shape index: {}]
  %s4 = inlined_call_operand.vmem [shape: f32[8,1,32], index: 4, kind: input, shape index: {}]
  %s5 = inlined_call_operand.vmem [shape: bf16[3,64,8], index: 5, kind: input, shape index: {}]
  %s6 = inlined_call_operand.vmem [shape: f32[3,1,8], index: 6, kind: input, shape index: {}]
  %s7 = inlined_call_operand.hbm [shape: f32[8,128], index: 7, kind: output, shape index: {}]
  %s8 = sld [smem:[#allocation0]]
  $region38: #{tpu_custom_call.1} parent=0
    _
  %s10 = ssub.s32 1, %s8
  %s11 = scalar_select 0, %s10, %s8
  $region1: #{tpu_custom_call.1} parent=0
    #allocation2 [shape = 'u8[4096]{0}', space=vmem, size = 0x1000, scoped, tag = 'output window, operand 0, single buffered']
    #allocation3 [shape = 's32[1]{0}', space=sflag, size = 0x4, scoped, tag = 'scoped memory for tpu_custom_call.1']
    %12 = vsyncpa [#allocation3], 0
    // Predicated region
    $region2: #{tpu_custom_call.1} parent=1 // pred_check
      _
    $region3: #{tpu_custom_call.1} parent=1 // pred_check_branch
      %14 = sbr.rel (0) target = $region5
    $region4: #{tpu_custom_call.1} parent=1 // pred_region
      _
    $region5: #{tpu_custom_call.1} parent=1 // pred_fallthru
      _
    // Predicated region
    $region6: #{tpu_custom_call.1} parent=1 // pred_check
      _
    $region7: #{tpu_custom_call.1} parent=1 // pred_check_branch
      %16 = sbr.rel (0) target = $region9
    $region8: #{tpu_custom_call.1} parent=1 // pred_region
      _
    $region9: #{tpu_custom_call.1} parent=1 // pred_fallthru
      _
    // Predicated region
    $region10: #{tpu_custom_call.1} parent=1 // pred_check
      _
    $region11: #{tpu_custom_call.1} parent=1 // pred_check_branch
      %18 = sbr.rel (0) target = $region13
    $region12: #{tpu_custom_call.1} parent=1 // pred_region
      _
    $region13: #{tpu_custom_call.1} parent=1 // pred_fallthru
      _
    // Predicated region
    $region14: #{tpu_custom_call.1} parent=1 // pred_check
      _
    $region15: #{tpu_custom_call.1} parent=1 // pred_check_branch
      %20 = sbr.rel (0) target = $region17
    $region16: #{tpu_custom_call.1} parent=1 // pred_region
      _
    $region17: #{tpu_custom_call.1} parent=1 // pred_fallthru
      _
    // Predicated region
    $region18: #{tpu_custom_call.1} parent=1 // pred_check
      _
    $region19: #{tpu_custom_call.1} parent=1 // pred_check_branch
      %22 = sbr.rel (0) target = $region21
    $region20: #{tpu_custom_call.1} parent=1 // pred_region
      _
    $region21: #{tpu_custom_call.1} parent=1 // pred_fallthru
      _
    // Predicated region
    $region22: #{tpu_custom_call.1} parent=1 // pred_check
      _
    $region23: #{tpu_custom_call.1} parent=1 // pred_check_branch
      %24 = sbr.rel (0) target = $region25
    $region24: #{tpu_custom_call.1} parent=1 // pred_region
      _
    $region25: #{tpu_custom_call.1} parent=1 // pred_fallthru
      _
    // Predicated region
    $region26: #{tpu_custom_call.1} parent=1 // pred_check
      _
    $region27: #{tpu_custom_call.1} parent=1 // pred_check_branch
      %26 = sbr.rel (0) target = $region29
    $region28: #{tpu_custom_call.1} parent=1 // pred_region
      _
    $region29: #{tpu_custom_call.1} parent=1 // pred_fallthru
      _
    %v28 = vld [vmem:[%s0] sm:$0xf]
    %v29 = vld [vmem:[%s1] sm:$0xf]
    %v30 = vld [vmem:[%s1 + $0x4] sm:$0xf]
    %v31 = vld [vmem:[%s1 + $0x8] sm:$0xf]
    %v32 = vld [vmem:[%s1 + $0xc] sm:$0xf]
    %v33 = vld [vmem:[%s1 + $0x10] sm:$0xf]
    %v34 = vld [vmem:[%s1 + $0x14] sm:$0xf]
    %v35 = vld [vmem:[%s1 + $0x18] sm:$0xf]
    %v36 = vld [vmem:[%s1 + $0x1c] sm:$0xf]
    %v37 = vld [vmem:[%s2] sm:$0x1]
    %v39 = vlaneseq
    %v40 = vshrl.u32 %v39, 7
    %v41 = vsub.s32 0, %v40
    %v42 = vrot.slane %v37, %v41
    %v52 = vunpack.c.l.b16 %v29
    %v53 = vunpack.c.l.b16 %v30
    %v54 = vunpack.c.l.b16 %v31
    %v55 = vunpack.c.l.b16 %v32
    %v56 = vunpack.c.l.b16 %v33
    %v57 = vunpack.c.l.b16 %v34
    %v58 = vunpack.c.l.b16 %v35
    %v59 = vunpack.c.l.b16 %v36
    %v60 = vpack.c.b16 %v53, %v52
    %v61 = vpack.c.b16 %v55, %v54
    %v62 = vpack.c.b16 %v57, %v56
    %v63 = vpack.c.b16 %v59, %v58
    %vm68 = vcmask 523264
    %v70 = vsel %vm68, %v28, 0
    %72 = vmatprep.subr.bf16.mxu0 0
    %73 = vmatpush1.bf16.msra.mxu0 %v60
    %74 = vmatprep.subr.bf16.mxu0 0
    %75 = vmatpush1.bf16.msra.mxu0 %v61
    %76 = vmatprep.subr.bf16.mxu0 0
    %77 = vmatpush1.bf16.msra.mxu0 %v62
    %78 = vmatprep.subr.bf16.mxu0 0
    %79 = vmatpush1.bf16.msra.mxu0 %v63
    %80 = vmatprep.subr.bf16.mxu0 0
    %81 = vmatpush1.bf16.msra.mxu0 0
    %82 = vmatprep.subr.bf16.mxu0 0
    %83 = vmatpush1.bf16.msra.mxu0 0
    %84 = vmatprep.subr.bf16.mxu0 0
    %85 = vmatpush1.bf16.msra.mxu0 0
    %86 = vmatprep.subr.bf16.mxu0 0
    %87 = vmatpush1.bf16.msra.mxu0 0
    %88 = vmatprep.subr.bf16.mxu0 0
    %89 = vmatpush1.bf16.msra.mxu0 0
    %90 = vmatprep.subr.bf16.mxu0 0
    %91 = vmatpush1.bf16.msra.mxu0 0
    %92 = vmatprep.subr.bf16.mxu0 0
    %93 = vmatpush1.bf16.msra.mxu0 0
    %94 = vmatprep.subr.bf16.mxu0 0
    %95 = vmatpush1.bf16.msra.mxu0 0
    %96 = vmatprep.subr.bf16.mxu0 0
    %97 = vmatpush1.bf16.msra.mxu0 0
    %98 = vmatprep.subr.bf16.mxu0 0
    %99 = vmatpush1.bf16.msra.mxu0 0
    %100 = vmatprep.subr.bf16.mxu0 0
    %101 = vmatpush1.bf16.msra.mxu0 0
    %102 = vmatprep.subr.bf16.mxu0 0
    %103 = vmatpush1.bf16.msra.mxu0 0
    %104 = vmatprep.mubr.bf16.mxu0 0
    %105 = vmatmul.mubr.bf16.gmra.mrb[0].mxu0 %v70
    %v106 = vpop.f32.mrb[0].mxu0
    %v107 = vadd.f32 %v42, %v106
    %v108 = vpop.f32.mrb[0].mxu0
    %v109 = vpop.f32.mrb[0].mxu0
    %v110 = vpop.f32.mrb[0].mxu0
    %111 = vdwg.mxu0
    %v112 = vmax.f32 %v107, 0.0
    %v113 = vpack.c.bf16 %v112, %v112
    %v114 = vld [vmem:[%s3] sm:$0xf]
    %v115 = vld [vmem:[%s3 + $0x4] sm:$0xf]
    %v116 = vld [vmem:[%s3 + $0x8] sm:$0xf]
    %v117 = vld [vmem:[%s3 + $0xc] sm:$0xf]
    %v118 = vld [vmem:[%s4] sm:$0x1]
    %v120 = vlaneseq
    %v121 = vshrl.u32 %v120, 7
    %v122 = vsub.s32 0, %v121
    %v123 = vrot.slane %v118, %v122
    %v129 = vunpack.c.l.b16 %v114
    %v130 = vunpack.c.l.b16 %v115
    %v131 = vunpack.c.l.b16 %v116
    %v132 = vunpack.c.l.b16 %v117
    %v133 = vpack.c.b16 %v130, %v129
    %v134 = vpack.c.b16 %v132, %v131
    %vm137 = vcmask 261120
    %v139 = vsel %vm137, %v113, 0
    %141 = vmatprep.subr.bf16.mxu0 0
    %142 = vmatpush1.bf16.msra.mxu0 %v133
    %143 = vmatprep.subr.bf16.mxu0 0
    %144 = vmatpush1.bf16.msra.mxu0 %v134
    %145 = vmatprep.subr.bf16.mxu0 0
    %146 = vmatpush1.bf16.msra.mxu0 0
    %147 = vmatprep.subr.bf16.mxu0 0
    %148 = vmatpush1.bf16.msra.mxu0 0
    %149 = vmatprep.subr.bf16.mxu0 0
    %150 = vmatpush1.bf16.msra.mxu0 0
    %151 = vmatprep.subr.bf16.mxu0 0
    %152 = vmatpush1.bf16.msra.mxu0 0
    %153 = vmatprep.subr.bf16.mxu0 0
    %154 = vmatpush1.bf16.msra.mxu0 0
    %155 = vmatprep.subr.bf16.mxu0 0
    %156 = vmatpush1.bf16.msra.mxu0 0
    %157 = vmatprep.subr.bf16.mxu0 0
    %158 = vmatpush1.bf16.msra.mxu0 0
    %159 = vmatprep.subr.bf16.mxu0 0
    %160 = vmatpush1.bf16.msra.mxu0 0
    %161 = vmatprep.subr.bf16.mxu0 0
    %162 = vmatpush1.bf16.msra.mxu0 0
    %163 = vmatprep.subr.bf16.mxu0 0
    %164 = vmatpush1.bf16.msra.mxu0 0
    %165 = vmatprep.subr.bf16.mxu0 0
    %166 = vmatpush1.bf16.msra.mxu0 0
    %167 = vmatprep.subr.bf16.mxu0 0
    %168 = vmatpush1.bf16.msra.mxu0 0
    %169 = vmatprep.subr.bf16.mxu0 0
    %170 = vmatpush1.bf16.msra.mxu0 0
    %171 = vmatprep.subr.bf16.mxu0 0
    %172 = vmatpush1.bf16.msra.mxu0 0
    %173 = vmatprep.mubr.bf16.mxu0 0
    %174 = vmatmul.mubr.bf16.gmra.mrb[0].mxu0 %v139
    %v175 = vpop.f32.mrb[0].mxu0
    %v176 = vadd.f32 %v123, %v175
    %v177 = vpop.f32.mrb[0].mxu0
    %v178 = vpop.f32.mrb[0].mxu0
    %v179 = vpop.f32.mrb[0].mxu0
    %180 = vdwg.mxu0
    %s181 = scalar_lea.vmem %s1, 32
    %v182 = vld [vmem:[%s181] sm:$0xf]
    %v183 = vld [vmem:[%s181 + $0x4] sm:$0xf]
    %v184 = vld [vmem:[%s181 + $0x8] sm:$0xf]
    %v185 = vld [vmem:[%s181 + $0xc] sm:$0xf]
    %v186 = vld [vmem:[%s181 + $0x10] sm:$0xf]
    %v187 = vld [vmem:[%s181 + $0x14] sm:$0xf]
    %v188 = vld [vmem:[%s181 + $0x18] sm:$0xf]
    %v189 = vld [vmem:[%s181 + $0x1c] sm:$0xf]
    %s190 = scalar_lea.vmem %s2, 1
    %v191 = vld [vmem:[%s190] sm:$0x1]
    %v193 = vlaneseq
    %v194 = vshrl.u32 %v193, 7
    %v195 = vsub.s32 0, %v194
    %v196 = vrot.slane %v191, %v195
    %v206 = vunpack.c.l.b16 %v182
    %v207 = vunpack.c.l.b16 %v183
    %v208 = vunpack.c.l.b16 %v184
    %v209 = vunpack.c.l.b16 %v185
    %v210 = vunpack.c.l.b16 %v186
    %v211 = vunpack.c.l.b16 %v187
    %v212 = vunpack.c.l.b16 %v188
    %v213 = vunpack.c.l.b16 %v189
    %v214 = vpack.c.b16 %v207, %v206
    %v215 = vpack.c.b16 %v209, %v208
    %v216 = vpack.c.b16 %v211, %v210
    %v217 = vpack.c.b16 %v213, %v212
    %222 = vmatprep.subr.bf16.mxu0 0
    %223 = vmatpush1.bf16.msra.mxu0 %v214
    %224 = vmatprep.subr.bf16.mxu0 0
    %225 = vmatpush1.bf16.msra.mxu0 %v215
    %226 = vmatprep.subr.bf16.mxu0 0
    %227 = vmatpush1.bf16.msra.mxu0 %v216
    %228 = vmatprep.subr.bf16.mxu0 0
    %229 = vmatpush1.bf16.msra.mxu0 %v217
    %230 = vmatprep.subr.bf16.mxu0 0
    %231 = vmatpush1.bf16.msra.mxu0 0
    %232 = vmatprep.subr.bf16.mxu0 0
    %233 = vmatpush1.bf16.msra.mxu0 0
    %234 = vmatprep.subr.bf16.mxu0 0
    %235 = vmatpush1.bf16.msra.mxu0 0
    %236 = vmatprep.subr.bf16.mxu0 0
    %237 = vmatpush1.bf16.msra.mxu0 0
    %238 = vmatprep.subr.bf16.mxu0 0
    %239 = vmatpush1.bf16.msra.mxu0 0
    %240 = vmatprep.subr.bf16.mxu0 0
    %241 = vmatpush1.bf16.msra.mxu0 0
    %242 = vmatprep.subr.bf16.mxu0 0
    %243 = vmatpush1.bf16.msra.mxu0 0
    %244 = vmatprep.subr.bf16.mxu0 0
    %245 = vmatpush1.bf16.msra.mxu0 0
    %246 = vmatprep.subr.bf16.mxu0 0
    %247 = vmatpush1.bf16.msra.mxu0 0
    %248 = vmatprep.subr.bf16.mxu0 0
    %249 = vmatpush1.bf16.msra.mxu0 0
    %250 = vmatprep.subr.bf16.mxu0 0
    %251 = vmatpush1.bf16.msra.mxu0 0
    %252 = vmatprep.subr.bf16.mxu0 0
    %253 = vmatpush1.bf16.msra.mxu0 0
    %254 = vmatprep.mubr.bf16.mxu0 0
    %255 = vmatmul.mubr.bf16.gmra.mrb[0].mxu0 %v70
    %v256 = vpop.f32.mrb[0].mxu0
    %v257 = vadd.f32 %v196, %v256
    %v258 = vpop.f32.mrb[0].mxu0
    %v259 = vpop.f32.mrb[0].mxu0
    %v260 = vpop.f32.mrb[0].mxu0
    %261 = vdwg.mxu0
    %v262 = vmax.f32 %v257, 0.0
    %v263 = vpack.c.bf16 %v262, %v262
    %s264 = scalar_lea.vmem %s3, 16
    %v265 = vld [vmem:[%s264] sm:$0xf]
    %v266 = vld [vmem:[%s264 + $0x4] sm:$0xf]
    %v267 = vld [vmem:[%s264 + $0x8] sm:$0xf]
    %v268 = vld [vmem:[%s264 + $0xc] sm:$0xf]
    %s269 = scalar_lea.vmem %s4, 1
    %v270 = vld [vmem:[%s269] sm:$0x1]
    %v272 = vlaneseq
    %v273 = vshrl.u32 %v272, 7
    %v274 = vsub.s32 0, %v273
    %v275 = vrot.slane %v270, %v274
    %v281 = vunpack.c.l.b16 %v265
    %v282 = vunpack.c.l.b16 %v266
    %v283 = vunpack.c.l.b16 %v267
    %v284 = vunpack.c.l.b16 %v268
    %v285 = vpack.c.b16 %v282, %v281
    %v286 = vpack.c.b16 %v284, %v283
    %v290 = vsel %vm137, %v263, 0
    %292 = vmatprep.subr.bf16.mxu0 0
    %293 = vmatpush1.bf16.msra.mxu0 %v285
    %294 = vmatprep.subr.bf16.mxu0 0
    %295 = vmatpush1.bf16.msra.mxu0 %v286
    %296 = vmatprep.subr.bf16.mxu0 0
    %297 = vmatpush1.bf16.msra.mxu0 0
    %298 = vmatprep.subr.bf16.mxu0 0
    %299 = vmatpush1.bf16.msra.mxu0 0
    %300 = vmatprep.subr.bf16.mxu0 0
    %301 = vmatpush1.bf16.msra.mxu0 0
    %302 = vmatprep.subr.bf16.mxu0 0
    %303 = vmatpush1.bf16.msra.mxu0 0
    %304 = vmatprep.subr.bf16.mxu0 0
    %305 = vmatpush1.bf16.msra.mxu0 0
    %306 = vmatprep.subr.bf16.mxu0 0
    %307 = vmatpush1.bf16.msra.mxu0 0
    %308 = vmatprep.subr.bf16.mxu0 0
    %309 = vmatpush1.bf16.msra.mxu0 0
    %310 = vmatprep.subr.bf16.mxu0 0
    %311 = vmatpush1.bf16.msra.mxu0 0
    %312 = vmatprep.subr.bf16.mxu0 0
    %313 = vmatpush1.bf16.msra.mxu0 0
    %314 = vmatprep.subr.bf16.mxu0 0
    %315 = vmatpush1.bf16.msra.mxu0 0
    %316 = vmatprep.subr.bf16.mxu0 0
    %317 = vmatpush1.bf16.msra.mxu0 0
    %318 = vmatprep.subr.bf16.mxu0 0
    %319 = vmatpush1.bf16.msra.mxu0 0
    %320 = vmatprep.subr.bf16.mxu0 0
    %321 = vmatpush1.bf16.msra.mxu0 0
    %322 = vmatprep.subr.bf16.mxu0 0
    %323 = vmatpush1.bf16.msra.mxu0 0
    %324 = vmatprep.mubr.bf16.mxu0 0
    %325 = vmatmul.mubr.bf16.gmra.mrb[0].mxu0 %v290
    %v326 = vpop.f32.mrb[0].mxu0
    %v327 = vadd.f32 %v275, %v326
    %v328 = vpop.f32.mrb[0].mxu0
    %v329 = vpop.f32.mrb[0].mxu0
    %v330 = vpop.f32.mrb[0].mxu0
    %331 = vdwg.mxu0
    %s332 = scalar_lea.vmem %s1, 64
    %v333 = vld [vmem:[%s332] sm:$0xf]
    %v334 = vld [vmem:[%s332 + $0x4] sm:$0xf]
    %v335 = vld [vmem:[%s332 + $0x8] sm:$0xf]
    %v336 = vld [vmem:[%s332 + $0xc] sm:$0xf]
    %v337 = vld [vmem:[%s332 + $0x10] sm:$0xf]
    %v338 = vld [vmem:[%s332 + $0x14] sm:$0xf]
    %v339 = vld [vmem:[%s332 + $0x18] sm:$0xf]
    %v340 = vld [vmem:[%s332 + $0x1c] sm:$0xf]
    %s341 = scalar_lea.vmem %s2, 2
    %v342 = vld [vmem:[%s341] sm:$0x1]
    %v344 = vlaneseq
    %v345 = vshrl.u32 %v344, 7
    %v346 = vsub.s32 0, %v345
    %v347 = vrot.slane %v342, %v346
    %v357 = vunpack.c.l.b16 %v333
    %v358 = vunpack.c.l.b16 %v334
    %v359 = vunpack.c.l.b16 %v335
    %v360 = vunpack.c.l.b16 %v336
    %v361 = vunpack.c.l.b16 %v337
    %v362 = vunpack.c.l.b16 %v338
    %v363 = vunpack.c.l.b16 %v339
    %v364 = vunpack.c.l.b16 %v340
    %v365 = vpack.c.b16 %v358, %v357
    %v366 = vpack.c.b16 %v360, %v359
    %v367 = vpack.c.b16 %v362, %v361
    %v368 = vpack.c.b16 %v364, %v363
    %373 = vmatprep.subr.bf16.mxu0 0
    %374 = vmatpush1.bf16.msra.mxu0 %v365
    %375 = vmatprep.subr.bf16.mxu0 0
    %376 = vmatpush1.bf16.msra.mxu0 %v366
    %377 = vmatprep.subr.bf16.mxu0 0
    %378 = vmatpush1.bf16.msra.mxu0 %v367
    %379 = vmatprep.subr.bf16.mxu0 0
    %380 = vmatpush1.bf16.msra.mxu0 %v368
    %381 = vmatprep.subr.bf16.mxu0 0
    %382 = vmatpush1.bf16.msra.mxu0 0
    %383 = vmatprep.subr.bf16.mxu0 0
    %384 = vmatpush1.bf16.msra.mxu0 0
    %385 = vmatprep.subr.bf16.mxu0 0
    %386 = vmatpush1.bf16.msra.mxu0 0
    %387 = vmatprep.subr.bf16.mxu0 0
    %388 = vmatpush1.bf16.msra.mxu0 0
    %389 = vmatprep.subr.bf16.mxu0 0
    %390 = vmatpush1.bf16.msra.mxu0 0
    %391 = vmatprep.subr.bf16.mxu0 0
    %392 = vmatpush1.bf16.msra.mxu0 0
    %393 = vmatprep.subr.bf16.mxu0 0
    %394 = vmatpush1.bf16.msra.mxu0 0
    %395 = vmatprep.subr.bf16.mxu0 0
    %396 = vmatpush1.bf16.msra.mxu0 0
    %397 = vmatprep.subr.bf16.mxu0 0
    %398 = vmatpush1.bf16.msra.mxu0 0
    %399 = vmatprep.subr.bf16.mxu0 0
    %400 = vmatpush1.bf16.msra.mxu0 0
    %401 = vmatprep.subr.bf16.mxu0 0
    %402 = vmatpush1.bf16.msra.mxu0 0
    %403 = vmatprep.subr.bf16.mxu0 0
    %404 = vmatpush1.bf16.msra.mxu0 0
    %405 = vmatprep.mubr.bf16.mxu0 0
    %406 = vmatmul.mubr.bf16.gmra.mrb[0].mxu0 %v70
    %v407 = vpop.f32.mrb[0].mxu0
    %v408 = vadd.f32 %v347, %v407
    %v409 = vpop.f32.mrb[0].mxu0
    %v410 = vpop.f32.mrb[0].mxu0
    %v411 = vpop.f32.mrb[0].mxu0
    %412 = vdwg.mxu0
    %v413 = vmax.f32 %v408, 0.0
    %v414 = vpack.c.bf16 %v413, %v413
    %s415 = scalar_lea.vmem %s3, 32
    %v416 = vld [vmem:[%s415] sm:$0xf]
    %v417 = vld [vmem:[%s415 + $0x4] sm:$0xf]
    %v418 = vld [vmem:[%s415 + $0x8] sm:$0xf]
    %v419 = vld [vmem:[%s415 + $0xc] sm:$0xf]
    %s420 = scalar_lea.vmem %s4, 2
    %v421 = vld [vmem:[%s420] sm:$0x1]
    %v423 = vlaneseq
    %v424 = vshrl.u32 %v423, 7
    %v425 = vsub.s32 0, %v424
    %v426 = vrot.slane %v421, %v425
    %v432 = vunpack.c.l.b16 %v416
    %v433 = vunpack.c.l.b16 %v417
    %v434 = vunpack.c.l.b16 %v418
    %v435 = vunpack.c.l.b16 %v419
    %v436 = vpack.c.b16 %v433, %v432
    %v437 = vpack.c.b16 %v435, %v434
    %v441 = vsel %vm137, %v414, 0
    %443 = vmatprep.subr.bf16.mxu0 0
    %444 = vmatpush1.bf16.msra.mxu0 %v436
    %445 = vmatprep.subr.bf16.mxu0 0
    %446 = vmatpush1.bf16.msra.mxu0 %v437
    %447 = vmatprep.subr.bf16.mxu0 0
    %448 = vmatpush1.bf16.msra.mxu0 0
    %449 = vmatprep.subr.bf16.mxu0 0
    %450 = vmatpush1.bf16.msra.mxu0 0
    %451 = vmatprep.subr.bf16.mxu0 0
    %452 = vmatpush1.bf16.msra.mxu0 0
    %453 = vmatprep.subr.bf16.mxu0 0
    %454 = vmatpush1.bf16.msra.mxu0 0
    %455 = vmatprep.subr.bf16.mxu0 0
    %456 = vmatpush1.bf16.msra.mxu0 0
    %457 = vmatprep.subr.bf16.mxu0 0
    %458 = vmatpush1.bf16.msra.mxu0 0
    %459 = vmatprep.subr.bf16.mxu0 0
    %460 = vmatpush1.bf16.msra.mxu0 0
    %461 = vmatprep.subr.bf16.mxu0 0
    %462 = vmatpush1.bf16.msra.mxu0 0
    %463 = vmatprep.subr.bf16.mxu0 0
    %464 = vmatpush1.bf16.msra.mxu0 0
    %465 = vmatprep.subr.bf16.mxu0 0
    %466 = vmatpush1.bf16.msra.mxu0 0
    %467 = vmatprep.subr.bf16.mxu0 0
    %468 = vmatpush1.bf16.msra.mxu0 0
    %469 = vmatprep.subr.bf16.mxu0 0
    %470 = vmatpush1.bf16.msra.mxu0 0
    %471 = vmatprep.subr.bf16.mxu0 0
    %472 = vmatpush1.bf16.msra.mxu0 0
    %473 = vmatprep.subr.bf16.mxu0 0
    %474 = vmatpush1.bf16.msra.mxu0 0
    %475 = vmatprep.mubr.bf16.mxu0 0
    %476 = vmatmul.mubr.bf16.gmra.mrb[0].mxu0 %v441
    %v477 = vpop.f32.mrb[0].mxu0
    %v478 = vadd.f32 %v426, %v477
    %v479 = vpop.f32.mrb[0].mxu0
    %v480 = vpop.f32.mrb[0].mxu0
    %v481 = vpop.f32.mrb[0].mxu0
    %482 = vdwg.mxu0
    %s483 = scalar_lea.vmem %s1, 96
    %v484 = vld [vmem:[%s483] sm:$0xf]
    %v485 = vld [vmem:[%s483 + $0x4] sm:$0xf]
    %v486 = vld [vmem:[%s483 + $0x8] sm:$0xf]
    %v487 = vld [vmem:[%s483 + $0xc] sm:$0xf]
    %v488 = vld [vmem:[%s483 + $0x10] sm:$0xf]
    %v489 = vld [vmem:[%s483 + $0x14] sm:$0xf]
    %v490 = vld [vmem:[%s483 + $0x18] sm:$0xf]
    %v491 = vld [vmem:[%s483 + $0x1c] sm:$0xf]
    %s492 = scalar_lea.vmem %s2, 3
    %v493 = vld [vmem:[%s492] sm:$0x1]
    %v495 = vlaneseq
    %v496 = vshrl.u32 %v495, 7
    %v497 = vsub.s32 0, %v496
    %v498 = vrot.slane %v493, %v497
    %v508 = vunpack.c.l.b16 %v484
    %v509 = vunpack.c.l.b16 %v485
    %v510 = vunpack.c.l.b16 %v486
    %v511 = vunpack.c.l.b16 %v487
    %v512 = vunpack.c.l.b16 %v488
    %v513 = vunpack.c.l.b16 %v489
    %v514 = vunpack.c.l.b16 %v490
    %v515 = vunpack.c.l.b16 %v491
    %v516 = vpack.c.b16 %v509, %v508
    %v517 = vpack.c.b16 %v511, %v510
    %v518 = vpack.c.b16 %v513, %v512
    %v519 = vpack.c.b16 %v515, %v514
    %524 = vmatprep.subr.bf16.mxu0 0
    %525 = vmatpush1.bf16.msra.mxu0 %v516
    %526 = vmatprep.subr.bf16.mxu0 0
    %527 = vmatpush1.bf16.msra.mxu0 %v517
    %528 = vmatprep.subr.bf16.mxu0 0
    %529 = vmatpush1.bf16.msra.mxu0 %v518
    %530 = vmatprep.subr.bf16.mxu0 0
    %531 = vmatpush1.bf16.msra.mxu0 %v519
    %532 = vmatprep.subr.bf16.mxu0 0
    %533 = vmatpush1.bf16.msra.mxu0 0
    %534 = vmatprep.subr.bf16.mxu0 0
    %535 = vmatpush1.bf16.msra.mxu0 0
    %536 = vmatprep.subr.bf16.mxu0 0
    %537 = vmatpush1.bf16.msra.mxu0 0
    %538 = vmatprep.subr.bf16.mxu0 0
    %539 = vmatpush1.bf16.msra.mxu0 0
    %540 = vmatprep.subr.bf16.mxu0 0
    %541 = vmatpush1.bf16.msra.mxu0 0
    %542 = vmatprep.subr.bf16.mxu0 0
    %543 = vmatpush1.bf16.msra.mxu0 0
    %544 = vmatprep.subr.bf16.mxu0 0
    %545 = vmatpush1.bf16.msra.mxu0 0
    %546 = vmatprep.subr.bf16.mxu0 0
    %547 = vmatpush1.bf16.msra.mxu0 0
    %548 = vmatprep.subr.bf16.mxu0 0
    %549 = vmatpush1.bf16.msra.mxu0 0
    %550 = vmatprep.subr.bf16.mxu0 0
    %551 = vmatpush1.bf16.msra.mxu0 0
    %552 = vmatprep.subr.bf16.mxu0 0
    %553 = vmatpush1.bf16.msra.mxu0 0
    %554 = vmatprep.subr.bf16.mxu0 0
    %555 = vmatpush1.bf16.msra.mxu0 0
    %556 = vmatprep.mubr.bf16.mxu0 0
    %557 = vmatmul.mubr.bf16.gmra.mrb[0].mxu0 %v70
    %v558 = vpop.f32.mrb[0].mxu0
    %v559 = vadd.f32 %v498, %v558
    %v560 = vpop.f32.mrb[0].mxu0
    %v561 = vpop.f32.mrb[0].mxu0
    %v562 = vpop.f32.mrb[0].mxu0
    %563 = vdwg.mxu0
    %v564 = vmax.f32 %v559, 0.0
    %v565 = vpack.c.bf16 %v564, %v564
    %s566 = scalar_lea.vmem %s3, 48
    %v567 = vld [vmem:[%s566] sm:$0xf]
    %v568 = vld [vmem:[%s566 + $0x4] sm:$0xf]
    %v569 = vld [vmem:[%s566 + $0x8] sm:$0xf]
    %v570 = vld [vmem:[%s566 + $0xc] sm:$0xf]
    %s571 = scalar_lea.vmem %s4, 3
    %v572 = vld [vmem:[%s571] sm:$0x1]
    %v574 = vlaneseq
    %v575 = vshrl.u32 %v574, 7
    %v576 = vsub.s32 0, %v575
    %v577 = vrot.slane %v572, %v576
    %v583 = vunpack.c.l.b16 %v567
    %v584 = vunpack.c.l.b16 %v568
    %v585 = vunpack.c.l.b16 %v569
    %v586 = vunpack.c.l.b16 %v570
    %v587 = vpack.c.b16 %v584, %v583
    %v588 = vpack.c.b16 %v586, %v585
    %v592 = vsel %vm137, %v565, 0
    %594 = vmatprep.subr.bf16.mxu0 0
    %595 = vmatpush1.bf16.msra.mxu0 %v587
    %596 = vmatprep.subr.bf16.mxu0 0
    %597 = vmatpush1.bf16.msra.mxu0 %v588
    %598 = vmatprep.subr.bf16.mxu0 0
    %599 = vmatpush1.bf16.msra.mxu0 0
    %600 = vmatprep.subr.bf16.mxu0 0
    %601 = vmatpush1.bf16.msra.mxu0 0
    %602 = vmatprep.subr.bf16.mxu0 0
    %603 = vmatpush1.bf16.msra.mxu0 0
    %604 = vmatprep.subr.bf16.mxu0 0
    %605 = vmatpush1.bf16.msra.mxu0 0
    %606 = vmatprep.subr.bf16.mxu0 0
    %607 = vmatpush1.bf16.msra.mxu0 0
    %608 = vmatprep.subr.bf16.mxu0 0
    %609 = vmatpush1.bf16.msra.mxu0 0
    %610 = vmatprep.subr.bf16.mxu0 0
    %611 = vmatpush1.bf16.msra.mxu0 0
    %612 = vmatprep.subr.bf16.mxu0 0
    %613 = vmatpush1.bf16.msra.mxu0 0
    %614 = vmatprep.subr.bf16.mxu0 0
    %615 = vmatpush1.bf16.msra.mxu0 0
    %616 = vmatprep.subr.bf16.mxu0 0
    %617 = vmatpush1.bf16.msra.mxu0 0
    %618 = vmatprep.subr.bf16.mxu0 0
    %619 = vmatpush1.bf16.msra.mxu0 0
    %620 = vmatprep.subr.bf16.mxu0 0
    %621 = vmatpush1.bf16.msra.mxu0 0
    %622 = vmatprep.subr.bf16.mxu0 0
    %623 = vmatpush1.bf16.msra.mxu0 0
    %624 = vmatprep.subr.bf16.mxu0 0
    %625 = vmatpush1.bf16.msra.mxu0 0
    %626 = vmatprep.mubr.bf16.mxu0 0
    %627 = vmatmul.mubr.bf16.gmra.mrb[0].mxu0 %v592
    %v628 = vpop.f32.mrb[0].mxu0
    %v629 = vadd.f32 %v577, %v628
    %v630 = vpop.f32.mrb[0].mxu0
    %v631 = vpop.f32.mrb[0].mxu0
    %v632 = vpop.f32.mrb[0].mxu0
    %633 = vdwg.mxu0
    %s634 = scalar_lea.vmem %s1, 128
    %v635 = vld [vmem:[%s634] sm:$0xf]
    %v636 = vld [vmem:[%s634 + $0x4] sm:$0xf]
    %v637 = vld [vmem:[%s634 + $0x8] sm:$0xf]
    %v638 = vld [vmem:[%s634 + $0xc] sm:$0xf]
    %v639 = vld [vmem:[%s634 + $0x10] sm:$0xf]
    %v640 = vld [vmem:[%s634 + $0x14] sm:$0xf]
    %v641 = vld [vmem:[%s634 + $0x18] sm:$0xf]
    %v642 = vld [vmem:[%s634 + $0x1c] sm:$0xf]
    %s643 = scalar_lea.vmem %s2, 4
    %v644 = vld [vmem:[%s643] sm:$0x1]
    %v646 = vlaneseq
    %v647 = vshrl.u32 %v646, 7
    %v648 = vsub.s32 0, %v647
    %v649 = vrot.slane %v644, %v648
    %v659 = vunpack.c.l.b16 %v635
    %v660 = vunpack.c.l.b16 %v636
    %v661 = vunpack.c.l.b16 %v637
    %v662 = vunpack.c.l.b16 %v638
    %v663 = vunpack.c.l.b16 %v639
    %v664 = vunpack.c.l.b16 %v640
    %v665 = vunpack.c.l.b16 %v641
    %v666 = vunpack.c.l.b16 %v642
    %v667 = vpack.c.b16 %v660, %v659
    %v668 = vpack.c.b16 %v662, %v661
    %v669 = vpack.c.b16 %v664, %v663
    %v670 = vpack.c.b16 %v666, %v665
    %675 = vmatprep.subr.bf16.mxu0 0
    %676 = vmatpush1.bf16.msra.mxu0 %v667
    %677 = vmatprep.subr.bf16.mxu0 0
    %678 = vmatpush1.bf16.msra.mxu0 %v668
    %679 = vmatprep.subr.bf16.mxu0 0
    %680 = vmatpush1.bf16.msra.mxu0 %v669
    %681 = vmatprep.subr.bf16.mxu0 0
    %682 = vmatpush1.bf16.msra.mxu0 %v670
    %683 = vmatprep.subr.bf16.mxu0 0
    %684 = vmatpush1.bf16.msra.mxu0 0
    %685 = vmatprep.subr.bf16.mxu0 0
    %686 = vmatpush1.bf16.msra.mxu0 0
    %687 = vmatprep.subr.bf16.mxu0 0
    %688 = vmatpush1.bf16.msra.mxu0 0
    %689 = vmatprep.subr.bf16.mxu0 0
    %690 = vmatpush1.bf16.msra.mxu0 0
    %691 = vmatprep.subr.bf16.mxu0 0
    %692 = vmatpush1.bf16.msra.mxu0 0
    %693 = vmatprep.subr.bf16.mxu0 0
    %694 = vmatpush1.bf16.msra.mxu0 0
    %695 = vmatprep.subr.bf16.mxu0 0
    %696 = vmatpush1.bf16.msra.mxu0 0
    %697 = vmatprep.subr.bf16.mxu0 0
    %698 = vmatpush1.bf16.msra.mxu0 0
    %699 = vmatprep.subr.bf16.mxu0 0
    %700 = vmatpush1.bf16.msra.mxu0 0
    %701 = vmatprep.subr.bf16.mxu0 0
    %702 = vmatpush1.bf16.msra.mxu0 0
    %703 = vmatprep.subr.bf16.mxu0 0
    %704 = vmatpush1.bf16.msra.mxu0 0
    %705 = vmatprep.subr.bf16.mxu0 0
    %706 = vmatpush1.bf16.msra.mxu0 0
    %707 = vmatprep.mubr.bf16.mxu0 0
    %708 = vmatmul.mubr.bf16.gmra.mrb[0].mxu0 %v70
    %v709 = vpop.f32.mrb[0].mxu0
    %v710 = vadd.f32 %v649, %v709
    %v711 = vpop.f32.mrb[0].mxu0
    %v712 = vpop.f32.mrb[0].mxu0
    %v713 = vpop.f32.mrb[0].mxu0
    %714 = vdwg.mxu0
    %v715 = vmax.f32 %v710, 0.0
    %v716 = vpack.c.bf16 %v715, %v715
    %s717 = scalar_lea.vmem %s3, 64
    %v718 = vld [vmem:[%s717] sm:$0xf]
    %v719 = vld [vmem:[%s717 + $0x4] sm:$0xf]
    %v720 = vld [vmem:[%s717 + $0x8] sm:$0xf]
    %v721 = vld [vmem:[%s717 + $0xc] sm:$0xf]
    %s722 = scalar_lea.vmem %s4, 4
    %v723 = vld [vmem:[%s722] sm:$0x1]
    %v725 = vlaneseq
    %v726 = vshrl.u32 %v725, 7
    %v727 = vsub.s32 0, %v726
    %v728 = vrot.slane %v723, %v727
    %v734 = vunpack.c.l.b16 %v718
    %v735 = vunpack.c.l.b16 %v719
    %v736 = vunpack.c.l.b16 %v720
    %v737 = vunpack.c.l.b16 %v721
    %v738 = vpack.c.b16 %v735, %v734
    %v739 = vpack.c.b16 %v737, %v736
    %v743 = vsel %vm137, %v716, 0
    %745 = vmatprep.subr.bf16.mxu0 0
    %746 = vmatpush1.bf16.msra.mxu0 %v738
    %747 = vmatprep.subr.bf16.mxu0 0
    %748 = vmatpush1.bf16.msra.mxu0 %v739
    %749 = vmatprep.subr.bf16.mxu0 0
    %750 = vmatpush1.bf16.msra.mxu0 0
    %751 = vmatprep.subr.bf16.mxu0 0
    %752 = vmatpush1.bf16.msra.mxu0 0
    %753 = vmatprep.subr.bf16.mxu0 0
    %754 = vmatpush1.bf16.msra.mxu0 0
    %755 = vmatprep.subr.bf16.mxu0 0
    %756 = vmatpush1.bf16.msra.mxu0 0
    %757 = vmatprep.subr.bf16.mxu0 0
    %758 = vmatpush1.bf16.msra.mxu0 0
    %759 = vmatprep.subr.bf16.mxu0 0
    %760 = vmatpush1.bf16.msra.mxu0 0
    %761 = vmatprep.subr.bf16.mxu0 0
    %762 = vmatpush1.bf16.msra.mxu0 0
    %763 = vmatprep.subr.bf16.mxu0 0
    %764 = vmatpush1.bf16.msra.mxu0 0
    %765 = vmatprep.subr.bf16.mxu0 0
    %766 = vmatpush1.bf16.msra.mxu0 0
    %767 = vmatprep.subr.bf16.mxu0 0
    %768 = vmatpush1.bf16.msra.mxu0 0
    %769 = vmatprep.subr.bf16.mxu0 0
    %770 = vmatpush1.bf16.msra.mxu0 0
    %771 = vmatprep.subr.bf16.mxu0 0
    %772 = vmatpush1.bf16.msra.mxu0 0
    %773 = vmatprep.subr.bf16.mxu0 0
    %774 = vmatpush1.bf16.msra.mxu0 0
    %775 = vmatprep.subr.bf16.mxu0 0
    %776 = vmatpush1.bf16.msra.mxu0 0
    %777 = vmatprep.mubr.bf16.mxu0 0
    %778 = vmatmul.mubr.bf16.gmra.mrb[0].mxu0 %v743
    %v779 = vpop.f32.mrb[0].mxu0
    %v780 = vadd.f32 %v728, %v779
    %v781 = vpop.f32.mrb[0].mxu0
    %v782 = vpop.f32.mrb[0].mxu0
    %v783 = vpop.f32.mrb[0].mxu0
    %784 = vdwg.mxu0
    %s785 = scalar_lea.vmem %s1, 160
    %v786 = vld [vmem:[%s785] sm:$0xf]
    %v787 = vld [vmem:[%s785 + $0x4] sm:$0xf]
    %v788 = vld [vmem:[%s785 + $0x8] sm:$0xf]
    %v789 = vld [vmem:[%s785 + $0xc] sm:$0xf]
    %v790 = vld [vmem:[%s785 + $0x10] sm:$0xf]
    %v791 = vld [vmem:[%s785 + $0x14] sm:$0xf]
    %v792 = vld [vmem:[%s785 + $0x18] sm:$0xf]
    %v793 = vld [vmem:[%s785 + $0x1c] sm:$0xf]
    %s794 = scalar_lea.vmem %s2, 5
    %v795 = vld [vmem:[%s794] sm:$0x1]
    %v797 = vlaneseq
    %v798 = vshrl.u32 %v797, 7
    %v799 = vsub.s32 0, %v798
    %v800 = vrot.slane %v795, %v799
    %v810 = vunpack.c.l.b16 %v786
    %v811 = vunpack.c.l.b16 %v787
    %v812 = vunpack.c.l.b16 %v788
    %v813 = vunpack.c.l.b16 %v789
    %v814 = vunpack.c.l.b16 %v790
    %v815 = vunpack.c.l.b16 %v791
    %v816 = vunpack.c.l.b16 %v792
    %v817 = vunpack.c.l.b16 %v793
    %v818 = vpack.c.b16 %v811, %v810
    %v819 = vpack.c.b16 %v813, %v812
    %v820 = vpack.c.b16 %v815, %v814
    %v821 = vpack.c.b16 %v817, %v816
    %826 = vmatprep.subr.bf16.mxu0 0
    %827 = vmatpush1.bf16.msra.mxu0 %v818
    %828 = vmatprep.subr.bf16.mxu0 0
    %829 = vmatpush1.bf16.msra.mxu0 %v819
    %830 = vmatprep.subr.bf16.mxu0 0
    %831 = vmatpush1.bf16.msra.mxu0 %v820
    %832 = vmatprep.subr.bf16.mxu0 0
    %833 = vmatpush1.bf16.msra.mxu0 %v821
    %834 = vmatprep.subr.bf16.mxu0 0
    %835 = vmatpush1.bf16.msra.mxu0 0
    %836 = vmatprep.subr.bf16.mxu0 0
    %837 = vmatpush1.bf16.msra.mxu0 0
    %838 = vmatprep.subr.bf16.mxu0 0
    %839 = vmatpush1.bf16.msra.mxu0 0
    %840 = vmatprep.subr.bf16.mxu0 0
    %841 = vmatpush1.bf16.msra.mxu0 0
    %842 = vmatprep.subr.bf16.mxu0 0
    %843 = vmatpush1.bf16.msra.mxu0 0
    %844 = vmatprep.subr.bf16.mxu0 0
    %845 = vmatpush1.bf16.msra.mxu0 0
    %846 = vmatprep.subr.bf16.mxu0 0
    %847 = vmatpush1.bf16.msra.mxu0 0
    %848 = vmatprep.subr.bf16.mxu0 0
    %849 = vmatpush1.bf16.msra.mxu0 0
    %850 = vmatprep.subr.bf16.mxu0 0
    %851 = vmatpush1.bf16.msra.mxu0 0
    %852 = vmatprep.subr.bf16.mxu0 0
    %853 = vmatpush1.bf16.msra.mxu0 0
    %854 = vmatprep.subr.bf16.mxu0 0
    %855 = vmatpush1.bf16.msra.mxu0 0
    %856 = vmatprep.subr.bf16.mxu0 0
    %857 = vmatpush1.bf16.msra.mxu0 0
    %858 = vmatprep.mubr.bf16.mxu0 0
    %859 = vmatmul.mubr.bf16.gmra.mrb[0].mxu0 %v70
    %v860 = vpop.f32.mrb[0].mxu0
    %v861 = vadd.f32 %v800, %v860
    %v862 = vpop.f32.mrb[0].mxu0
    %v863 = vpop.f32.mrb[0].mxu0
    %v864 = vpop.f32.mrb[0].mxu0
    %865 = vdwg.mxu0
    %v866 = vmax.f32 %v861, 0.0
    %v867 = vpack.c.bf16 %v866, %v866
    %s868 = scalar_lea.vmem %s3, 80
    %v869 = vld [vmem:[%s868] sm:$0xf]
    %v870 = vld [vmem:[%s868 + $0x4] sm:$0xf]
    %v871 = vld [vmem:[%s868 + $0x8] sm:$0xf]
    %v872 = vld [vmem:[%s868 + $0xc] sm:$0xf]
    %s873 = scalar_lea.vmem %s4, 5
    %v874 = vld [vmem:[%s873] sm:$0x1]
    %v876 = vlaneseq
    %v877 = vshrl.u32 %v876, 7
    %v878 = vsub.s32 0, %v877
    %v879 = vrot.slane %v874, %v878
    %v885 = vunpack.c.l.b16 %v869
    %v886 = vunpack.c.l.b16 %v870
    %v887 = vunpack.c.l.b16 %v871
    %v888 = vunpack.c.l.b16 %v872
    %v889 = vpack.c.b16 %v886, %v885
    %v890 = vpack.c.b16 %v888, %v887
    %v894 = vsel %vm137, %v867, 0
    %896 = vmatprep.subr.bf16.mxu0 0
    %897 = vmatpush1.bf16.msra.mxu0 %v889
    %898 = vmatprep.subr.bf16.mxu0 0
    %899 = vmatpush1.bf16.msra.mxu0 %v890
    %900 = vmatprep.subr.bf16.mxu0 0
    %901 = vmatpush1.bf16.msra.mxu0 0
    %902 = vmatprep.subr.bf16.mxu0 0
    %903 = vmatpush1.bf16.msra.mxu0 0
    %904 = vmatprep.subr.bf16.mxu0 0
    %905 = vmatpush1.bf16.msra.mxu0 0
    %906 = vmatprep.subr.bf16.mxu0 0
    %907 = vmatpush1.bf16.msra.mxu0 0
    %908 = vmatprep.subr.bf16.mxu0 0
    %909 = vmatpush1.bf16.msra.mxu0 0
    %910 = vmatprep.subr.bf16.mxu0 0
    %911 = vmatpush1.bf16.msra.mxu0 0
    %912 = vmatprep.subr.bf16.mxu0 0
    %913 = vmatpush1.bf16.msra.mxu0 0
    %914 = vmatprep.subr.bf16.mxu0 0
    %915 = vmatpush1.bf16.msra.mxu0 0
    %916 = vmatprep.subr.bf16.mxu0 0
    %917 = vmatpush1.bf16.msra.mxu0 0
    %918 = vmatprep.subr.bf16.mxu0 0
    %919 = vmatpush1.bf16.msra.mxu0 0
    %920 = vmatprep.subr.bf16.mxu0 0
    %921 = vmatpush1.bf16.msra.mxu0 0
    %922 = vmatprep.subr.bf16.mxu0 0
    %923 = vmatpush1.bf16.msra.mxu0 0
    %924 = vmatprep.subr.bf16.mxu0 0
    %925 = vmatpush1.bf16.msra.mxu0 0
    %926 = vmatprep.subr.bf16.mxu0 0
    %927 = vmatpush1.bf16.msra.mxu0 0
    %928 = vmatprep.mubr.bf16.mxu0 0
    %929 = vmatmul.mubr.bf16.gmra.mrb[0].mxu0 %v894
    %v930 = vpop.f32.mrb[0].mxu0
    %v931 = vadd.f32 %v879, %v930
    %v932 = vpop.f32.mrb[0].mxu0
    %v933 = vpop.f32.mrb[0].mxu0
    %v934 = vpop.f32.mrb[0].mxu0
    %935 = vdwg.mxu0
    %s936 = scalar_lea.vmem %s1, 192
    %v937 = vld [vmem:[%s936] sm:$0xf]
    %v938 = vld [vmem:[%s936 + $0x4] sm:$0xf]
    %v939 = vld [vmem:[%s936 + $0x8] sm:$0xf]
    %v940 = vld [vmem:[%s936 + $0xc] sm:$0xf]
    %v941 = vld [vmem:[%s936 + $0x10] sm:$0xf]
    %v942 = vld [vmem:[%s936 + $0x14] sm:$0xf]
    %v943 = vld [vmem:[%s936 + $0x18] sm:$0xf]
    %v944 = vld [vmem:[%s936 + $0x1c] sm:$0xf]
    %s945 = scalar_lea.vmem %s2, 6
    %v946 = vld [vmem:[%s945] sm:$0x1]
    %v948 = vlaneseq
    %v949 = vshrl.u32 %v948, 7
    %v950 = vsub.s32 0, %v949
    %v951 = vrot.slane %v946, %v950
    %v961 = vunpack.c.l.b16 %v937
    %v962 = vunpack.c.l.b16 %v938
    %v963 = vunpack.c.l.b16 %v939
    %v964 = vunpack.c.l.b16 %v940
    %v965 = vunpack.c.l.b16 %v941
    %v966 = vunpack.c.l.b16 %v942
    %v967 = vunpack.c.l.b16 %v943
    %v968 = vunpack.c.l.b16 %v944
    %v969 = vpack.c.b16 %v962, %v961
    %v970 = vpack.c.b16 %v964, %v963
    %v971 = vpack.c.b16 %v966, %v965
    %v972 = vpack.c.b16 %v968, %v967
    %977 = vmatprep.subr.bf16.mxu0 0
    %978 = vmatpush1.bf16.msra.mxu0 %v969
    %979 = vmatprep.subr.bf16.mxu0 0
    %980 = vmatpush1.bf16.msra.mxu0 %v970
    %981 = vmatprep.subr.bf16.mxu0 0
    %982 = vmatpush1.bf16.msra.mxu0 %v971
    %983 = vmatprep.subr.bf16.mxu0 0
    %984 = vmatpush1.bf16.msra.mxu0 %v972
    %985 = vmatprep.subr.bf16.mxu0 0
    %986 = vmatpush1.bf16.msra.mxu0 0
    %987 = vmatprep.subr.bf16.mxu0 0
    %988 = vmatpush1.bf16.msra.mxu0 0
    %989 = vmatprep.subr.bf16.mxu0 0
    %990 = vmatpush1.bf16.msra.mxu0 0
    %991 = vmatprep.subr.bf16.mxu0 0
    %992 = vmatpush1.bf16.msra.mxu0 0
    %993 = vmatprep.subr.bf16.mxu0 0
    %994 = vmatpush1.bf16.msra.mxu0 0
    %995 = vmatprep.subr.bf16.mxu0 0
    %996 = vmatpush1.bf16.msra.mxu0 0
    %997 = vmatprep.subr.bf16.mxu0 0
    %998 = vmatpush1.bf16.msra.mxu0 0
    %999 = vmatprep.subr.bf16.mxu0 0
    %1000 = vmatpush1.bf16.msra.mxu0 0
    %1001 = vmatprep.subr.bf16.mxu0 0
    %1002 = vmatpush1.bf16.msra.mxu0 0
    %1003 = vmatprep.subr.bf16.mxu0 0
    %1004 = vmatpush1.bf16.msra.mxu0 0
    %1005 = vmatprep.subr.bf16.mxu0 0
    %1006 = vmatpush1.bf16.msra.mxu0 0
    %1007 = vmatprep.subr.bf16.mxu0 0
    %1008 = vmatpush1.bf16.msra.mxu0 0
    %1009 = vmatprep.mubr.bf16.mxu0 0
    %1010 = vmatmul.mubr.bf16.gmra.mrb[0].mxu0 %v70
    %v1011 = vpop.f32.mrb[0].mxu0
    %v1012 = vadd.f32 %v951, %v1011
    %v1013 = vpop.f32.mrb[0].mxu0
    %v1014 = vpop.f32.mrb[0].mxu0
    %v1015 = vpop.f32.mrb[0].mxu0
    %1016 = vdwg.mxu0
    %v1017 = vmax.f32 %v1012, 0.0
    %v1018 = vpack.c.bf16 %v1017, %v1017
    %s1019 = scalar_lea.vmem %s3, 96
    %v1020 = vld [vmem:[%s1019] sm:$0xf]
    %v1021 = vld [vmem:[%s1019 + $0x4] sm:$0xf]
    %v1022 = vld [vmem:[%s1019 + $0x8] sm:$0xf]
    %v1023 = vld [vmem:[%s1019 + $0xc] sm:$0xf]
    %s1024 = scalar_lea.vmem %s4, 6
    %v1025 = vld [vmem:[%s1024] sm:$0x1]
    %v1027 = vlaneseq
    %v1028 = vshrl.u32 %v1027, 7
    %v1029 = vsub.s32 0, %v1028
    %v1030 = vrot.slane %v1025, %v1029
    %v1036 = vunpack.c.l.b16 %v1020
    %v1037 = vunpack.c.l.b16 %v1021
    %v1038 = vunpack.c.l.b16 %v1022
    %v1039 = vunpack.c.l.b16 %v1023
    %v1040 = vpack.c.b16 %v1037, %v1036
    %v1041 = vpack.c.b16 %v1039, %v1038
    %v1045 = vsel %vm137, %v1018, 0
    %1047 = vmatprep.subr.bf16.mxu0 0
    %1048 = vmatpush1.bf16.msra.mxu0 %v1040
    %1049 = vmatprep.subr.bf16.mxu0 0
    %1050 = vmatpush1.bf16.msra.mxu0 %v1041
    %1051 = vmatprep.subr.bf16.mxu0 0
    %1052 = vmatpush1.bf16.msra.mxu0 0
    %1053 = vmatprep.subr.bf16.mxu0 0
    %1054 = vmatpush1.bf16.msra.mxu0 0
    %1055 = vmatprep.subr.bf16.mxu0 0
    %1056 = vmatpush1.bf16.msra.mxu0 0
    %1057 = vmatprep.subr.bf16.mxu0 0
    %1058 = vmatpush1.bf16.msra.mxu0 0
    %1059 = vmatprep.subr.bf16.mxu0 0
    %1060 = vmatpush1.bf16.msra.mxu0 0
    %1061 = vmatprep.subr.bf16.mxu0 0
    %1062 = vmatpush1.bf16.msra.mxu0 0
    %1063 = vmatprep.subr.bf16.mxu0 0
    %1064 = vmatpush1.bf16.msra.mxu0 0
    %1065 = vmatprep.subr.bf16.mxu0 0
    %1066 = vmatpush1.bf16.msra.mxu0 0
    %1067 = vmatprep.subr.bf16.mxu0 0
    %1068 = vmatpush1.bf16.msra.mxu0 0
    %1069 = vmatprep.subr.bf16.mxu0 0
    %1070 = vmatpush1.bf16.msra.mxu0 0
    %1071 = vmatprep.subr.bf16.mxu0 0
    %1072 = vmatpush1.bf16.msra.mxu0 0
    %1073 = vmatprep.subr.bf16.mxu0 0
    %1074 = vmatpush1.bf16.msra.mxu0 0
    %1075 = vmatprep.subr.bf16.mxu0 0
    %1076 = vmatpush1.bf16.msra.mxu0 0
    %1077 = vmatprep.subr.bf16.mxu0 0
    %1078 = vmatpush1.bf16.msra.mxu0 0
    %1079 = vmatprep.mubr.bf16.mxu0 0
    %1080 = vmatmul.mubr.bf16.gmra.mrb[0].mxu0 %v1045
    %v1081 = vpop.f32.mrb[0].mxu0
    %v1082 = vadd.f32 %v1030, %v1081
    %v1083 = vpop.f32.mrb[0].mxu0
    %v1084 = vpop.f32.mrb[0].mxu0
    %v1085 = vpop.f32.mrb[0].mxu0
    %1086 = vdwg.mxu0
    %s1087 = scalar_lea.vmem %s1, 224
    %v1088 = vld [vmem:[%s1087] sm:$0xf]
    %v1089 = vld [vmem:[%s1087 + $0x4] sm:$0xf]
    %v1090 = vld [vmem:[%s1087 + $0x8] sm:$0xf]
    %v1091 = vld [vmem:[%s1087 + $0xc] sm:$0xf]
    %v1092 = vld [vmem:[%s1087 + $0x10] sm:$0xf]
    %v1093 = vld [vmem:[%s1087 + $0x14] sm:$0xf]
    %v1094 = vld [vmem:[%s1087 + $0x18] sm:$0xf]
    %v1095 = vld [vmem:[%s1087 + $0x1c] sm:$0xf]
    %s1096 = scalar_lea.vmem %s2, 7
    %v1097 = vld [vmem:[%s1096] sm:$0x1]
    %v1099 = vlaneseq
    %v1100 = vshrl.u32 %v1099, 7
    %v1101 = vsub.s32 0, %v1100
    %v1102 = vrot.slane %v1097, %v1101
    %v1112 = vunpack.c.l.b16 %v1088
    %v1113 = vunpack.c.l.b16 %v1089
    %v1114 = vunpack.c.l.b16 %v1090
    %v1115 = vunpack.c.l.b16 %v1091
    %v1116 = vunpack.c.l.b16 %v1092
    %v1117 = vunpack.c.l.b16 %v1093
    %v1118 = vunpack.c.l.b16 %v1094
    %v1119 = vunpack.c.l.b16 %v1095
    %v1120 = vpack.c.b16 %v1113, %v1112
    %v1121 = vpack.c.b16 %v1115, %v1114
    %v1122 = vpack.c.b16 %v1117, %v1116
    %v1123 = vpack.c.b16 %v1119, %v1118
    %1128 = vmatprep.subr.bf16.mxu0 0
    %1129 = vmatpush1.bf16.msra.mxu0 %v1120
    %1130 = vmatprep.subr.bf16.mxu0 0
    %1131 = vmatpush1.bf16.msra.mxu0 %v1121
    %1132 = vmatprep.subr.bf16.mxu0 0
    %1133 = vmatpush1.bf16.msra.mxu0 %v1122
    %1134 = vmatprep.subr.bf16.mxu0 0
    %1135 = vmatpush1.bf16.msra.mxu0 %v1123
    %1136 = vmatprep.subr.bf16.mxu0 0
    %1137 = vmatpush1.bf16.msra.mxu0 0
    %1138 = vmatprep.subr.bf16.mxu0 0
    %1139 = vmatpush1.bf16.msra.mxu0 0
    %1140 = vmatprep.subr.bf16.mxu0 0
    %1141 = vmatpush1.bf16.msra.mxu0 0
    %1142 = vmatprep.subr.bf16.mxu0 0
    %1143 = vmatpush1.bf16.msra.mxu0 0
    %1144 = vmatprep.subr.bf16.mxu0 0
    %1145 = vmatpush1.bf16.msra.mxu0 0
    %1146 = vmatprep.subr.bf16.mxu0 0
    %1147 = vmatpush1.bf16.msra.mxu0 0
    %1148 = vmatprep.subr.bf16.mxu0 0
    %1149 = vmatpush1.bf16.msra.mxu0 0
    %1150 = vmatprep.subr.bf16.mxu0 0
    %1151 = vmatpush1.bf16.msra.mxu0 0
    %1152 = vmatprep.subr.bf16.mxu0 0
    %1153 = vmatpush1.bf16.msra.mxu0 0
    %1154 = vmatprep.subr.bf16.mxu0 0
    %1155 = vmatpush1.bf16.msra.mxu0 0
    %1156 = vmatprep.subr.bf16.mxu0 0
    %1157 = vmatpush1.bf16.msra.mxu0 0
    %1158 = vmatprep.subr.bf16.mxu0 0
    %1159 = vmatpush1.bf16.msra.mxu0 0
    %1160 = vmatprep.mubr.bf16.mxu0 0
    %1161 = vmatmul.mubr.bf16.gmra.mrb[0].mxu0 %v70
    %v1162 = vpop.f32.mrb[0].mxu0
    %v1163 = vadd.f32 %v1102, %v1162
    %v1164 = vpop.f32.mrb[0].mxu0
    %v1165 = vpop.f32.mrb[0].mxu0
    %v1166 = vpop.f32.mrb[0].mxu0
    %1167 = vdwg.mxu0
    %v1168 = vmax.f32 %v1163, 0.0
    %v1169 = vpack.c.bf16 %v1168, %v1168
    %s1170 = scalar_lea.vmem %s3, 112
    %v1171 = vld [vmem:[%s1170] sm:$0xf]
    %v1172 = vld [vmem:[%s1170 + $0x4] sm:$0xf]
    %v1173 = vld [vmem:[%s1170 + $0x8] sm:$0xf]
    %v1174 = vld [vmem:[%s1170 + $0xc] sm:$0xf]
    %s1175 = scalar_lea.vmem %s4, 7
    %v1176 = vld [vmem:[%s1175] sm:$0x1]
    %v1178 = vlaneseq
    %v1179 = vshrl.u32 %v1178, 7
    %v1180 = vsub.s32 0, %v1179
    %v1181 = vrot.slane %v1176, %v1180
    %v1187 = vunpack.c.l.b16 %v1171
    %v1188 = vunpack.c.l.b16 %v1172
    %v1189 = vunpack.c.l.b16 %v1173
    %v1190 = vunpack.c.l.b16 %v1174
    %v1191 = vpack.c.b16 %v1188, %v1187
    %v1192 = vpack.c.b16 %v1190, %v1189
    %v1196 = vsel %vm137, %v1169, 0
    %1198 = vmatprep.subr.bf16.mxu0 0
    %1199 = vmatpush1.bf16.msra.mxu0 %v1191
    %1200 = vmatprep.subr.bf16.mxu0 0
    %1201 = vmatpush1.bf16.msra.mxu0 %v1192
    %1202 = vmatprep.subr.bf16.mxu0 0
    %1203 = vmatpush1.bf16.msra.mxu0 0
    %1204 = vmatprep.subr.bf16.mxu0 0
    %1205 = vmatpush1.bf16.msra.mxu0 0
    %1206 = vmatprep.subr.bf16.mxu0 0
    %1207 = vmatpush1.bf16.msra.mxu0 0
    %1208 = vmatprep.subr.bf16.mxu0 0
    %1209 = vmatpush1.bf16.msra.mxu0 0
    %1210 = vmatprep.subr.bf16.mxu0 0
    %1211 = vmatpush1.bf16.msra.mxu0 0
    %1212 = vmatprep.subr.bf16.mxu0 0
    %1213 = vmatpush1.bf16.msra.mxu0 0
    %1214 = vmatprep.subr.bf16.mxu0 0
    %1215 = vmatpush1.bf16.msra.mxu0 0
    %1216 = vmatprep.subr.bf16.mxu0 0
    %1217 = vmatpush1.bf16.msra.mxu0 0
    %1218 = vmatprep.subr.bf16.mxu0 0
    %1219 = vmatpush1.bf16.msra.mxu0 0
    %1220 = vmatprep.subr.bf16.mxu0 0
    %1221 = vmatpush1.bf16.msra.mxu0 0
    %1222 = vmatprep.subr.bf16.mxu0 0
    %1223 = vmatpush1.bf16.msra.mxu0 0
    %1224 = vmatprep.subr.bf16.mxu0 0
    %1225 = vmatpush1.bf16.msra.mxu0 0
    %1226 = vmatprep.subr.bf16.mxu0 0
    %1227 = vmatpush1.bf16.msra.mxu0 0
    %1228 = vmatprep.subr.bf16.mxu0 0
    %1229 = vmatpush1.bf16.msra.mxu0 0
    %1230 = vmatprep.mubr.bf16.mxu0 0
    %1231 = vmatmul.mubr.bf16.gmra.mrb[0].mxu0 %v1196
    %v1232 = vpop.f32.mrb[0].mxu0
    %v1233 = vadd.f32 %v1181, %v1232
    %v1234 = vpop.f32.mrb[0].mxu0
    %v1235 = vpop.f32.mrb[0].mxu0
    %v1236 = vpop.f32.mrb[0].mxu0
    %1237 = vdwg.mxu0
    %v1238 = vlaneseq
    %v1239 = vand.u32 %v1238, 127
    %v1240 = vld [vmem:[%s5] sm:$0xf]
    %v1241 = vld [vmem:[%s5 + $0x4] sm:$0xf]
    %v1242 = vld [vmem:[%s5 + $0x8] sm:$0xf]
    %v1243 = vld [vmem:[%s5 + $0xc] sm:$0xf]
    %v1244 = vld [vmem:[%s5 + $0x10] sm:$0xf]
    %v1245 = vld [vmem:[%s5 + $0x14] sm:$0xf]
    %v1246 = vld [vmem:[%s5 + $0x18] sm:$0xf]
    %v1247 = vld [vmem:[%s5 + $0x1c] sm:$0xf]
    %v1248 = vld [vmem:[%s6] sm:$0x1]
    %v1250 = vlaneseq
    %v1251 = vshrl.u32 %v1250, 7
    %v1252 = vsub.s32 0, %v1251
    %v1253 = vrot.slane %v1248, %v1252
    %v1263 = vunpack.c.l.b16 %v1240
    %v1264 = vunpack.c.l.b16 %v1241
    %v1265 = vunpack.c.l.b16 %v1242
    %v1266 = vunpack.c.l.b16 %v1243
    %v1267 = vunpack.c.l.b16 %v1244
    %v1268 = vunpack.c.l.b16 %v1245
    %v1269 = vunpack.c.l.b16 %v1246
    %v1270 = vunpack.c.l.b16 %v1247
    %v1271 = vpack.c.b16 %v1264, %v1263
    %v1272 = vpack.c.b16 %v1266, %v1265
    %v1273 = vpack.c.b16 %v1268, %v1267
    %v1274 = vpack.c.b16 %v1270, %v1269
    %1279 = vmatprep.subr.bf16.mxu0 0
    %1280 = vmatpush1.bf16.msra.mxu0 %v1271
    %1281 = vmatprep.subr.bf16.mxu0 0
    %1282 = vmatpush1.bf16.msra.mxu0 %v1272
    %1283 = vmatprep.subr.bf16.mxu0 0
    %1284 = vmatpush1.bf16.msra.mxu0 %v1273
    %1285 = vmatprep.subr.bf16.mxu0 0
    %1286 = vmatpush1.bf16.msra.mxu0 %v1274
    %1287 = vmatprep.subr.bf16.mxu0 0
    %1288 = vmatpush1.bf16.msra.mxu0 0
    %1289 = vmatprep.subr.bf16.mxu0 0
    %1290 = vmatpush1.bf16.msra.mxu0 0
    %1291 = vmatprep.subr.bf16.mxu0 0
    %1292 = vmatpush1.bf16.msra.mxu0 0
    %1293 = vmatprep.subr.bf16.mxu0 0
    %1294 = vmatpush1.bf16.msra.mxu0 0
    %1295 = vmatprep.subr.bf16.mxu0 0
    %1296 = vmatpush1.bf16.msra.mxu0 0
    %1297 = vmatprep.subr.bf16.mxu0 0
    %1298 = vmatpush1.bf16.msra.mxu0 0
    %1299 = vmatprep.subr.bf16.mxu0 0
    %1300 = vmatpush1.bf16.msra.mxu0 0
    %1301 = vmatprep.subr.bf16.mxu0 0
    %1302 = vmatpush1.bf16.msra.mxu0 0
    %1303 = vmatprep.subr.bf16.mxu0 0
    %1304 = vmatpush1.bf16.msra.mxu0 0
    %1305 = vmatprep.subr.bf16.mxu0 0
    %1306 = vmatpush1.bf16.msra.mxu0 0
    %1307 = vmatprep.subr.bf16.mxu0 0
    %1308 = vmatpush1.bf16.msra.mxu0 0
    %1309 = vmatprep.subr.bf16.mxu0 0
    %1310 = vmatpush1.bf16.msra.mxu0 0
    %1311 = vmatprep.mubr.bf16.mxu0 0
    %1312 = vmatmul.mubr.bf16.gmra.mrb[0].mxu0 %v70
    %v1313 = vpop.f32.mrb[0].mxu0
    %v1314 = vadd.f32 %v1253, %v1313
    %v1315 = vpop.f32.mrb[0].mxu0
    %v1316 = vpop.f32.mrb[0].mxu0
    %v1317 = vpop.f32.mrb[0].mxu0
    %1318 = vdwg.mxu0
    %vm1319 = vcmask 64512
    %v1320 = vsel %vm1319, %v1314, -inf
    %1321 = vmax.xlane.f32.xlu0 %v1320
    %v1322 = vpop.xlane.xlu0 %1321
    %vm1323 = vcmp.eq.f32.partialorder %v1314, %v1322
    %v1324 = vsel %vm1323, %v1239, 8
    %v1325 = vsel %vm1319, %v1324, 2147483647
    %v1326 = vand.u32 %v1325, 65535
    %v1327 = vshra.s32 %v1325, 16
    %v1328 = vcvt.s32.f32 %v1326
    %v1329 = vcvt.s32.f32 %v1327
    %1330 = vmin.xlane.f32.xlu0 %v1329
    %v1331 = vpop.xlane.xlu0 %1330
    %vm1332 = vcmp.eq.f32.partialorder %v1329, %v1331
    %v1333 = vsel %vm1332, %v1328, inf
    %1334 = vmin.xlane.f32.xlu0 %v1333
    %v1335 = vpop.xlane.xlu0 %1334
    %v1336 = vcvt.f32.s32 %v1335
    %v1337 = vcvt.f32.s32 %v1331
    %v1338 = vshll.u32 %v1337, 16
    %v1339 = vadd.s32 %v1338, %v1336
    %vm1340 = vcmp.eq.s32.totalorder %v1239, %v1339
    %v1341 = vsel %vm1340, -1e+30, %v1314
    %v1342 = vsel %vm1319, %v1341, -inf
    %1343 = vmax.xlane.f32.xlu0 %v1342
    %v1344 = vpop.xlane.xlu0 %1343
    %vm1345 = vcmp.eq.f32.partialorder %v1341, %v1344
    %v1346 = vsel %vm1345, %v1239, 8
    %v1347 = vsel %vm1319, %v1346, 2147483647
    %v1348 = vand.u32 %v1347, 65535
    %v1349 = vshra.s32 %v1347, 16
    %v1350 = vcvt.s32.f32 %v1348
    %v1351 = vcvt.s32.f32 %v1349
    %1352 = vmin.xlane.f32.xlu0 %v1351
    %v1353 = vpop.xlane.xlu0 %1352
    %vm1354 = vcmp.eq.f32.partialorder %v1351, %v1353
    %v1355 = vsel %vm1354, %v1350, inf
    %1356 = vmin.xlane.f32.xlu0 %v1355
    %v1357 = vpop.xlane.xlu0 %1356
    %v1358 = vcvt.f32.s32 %v1357
    %v1359 = vcvt.f32.s32 %v1353
    %v1360 = vshll.u32 %v1359, 16
    %v1361 = vadd.s32 %v1360, %v1358
    %vm1362 = vcmp.eq.s32.totalorder %v1239, %v1361
    %v1363 = vsub.f32 %v1322, %v1322
    %v1364 = vmul.f32 %v1363, 1.442695
    %v1365 = vpow.pop %v1364
    %v1366 = vsub.f32 %v1344, %v1322
    %v1367 = vmul.f32 %v1366, 1.442695
    %v1368 = vpow.pop %v1367
    %v1369 = vadd.f32 %v1365, %v1368
    %v1370 = vrcp.pop %v1369
    %v1371 = vsel %vm1340, 1, 0
    %v1372 = vcvt.s32.f32 %v1371
    %v1373 = vmul.f32 %v1365, %v1370
    %v1374 = vmul.f32 %v1372, %v1373
    %v1375 = vadd.f32 %v1374, 0.0
    %v1376 = vsel %vm1362, 1, 0
    %v1377 = vcvt.s32.f32 %v1376
    %v1378 = vmul.f32 %v1368, %v1370
    %v1379 = vmul.f32 %v1377, %v1378
    %v1380 = vadd.f32 %v1375, %v1379
    %1382 = vset.pattern.permute.xlu0 0
    %1383 = vperm.xlu0 %1382, %v1380
    %v1384 = vpop.permute.xlu0 %1383
    %v1386 = vmul.f32 %v1384, %v176
    %v1387 = vadd.f32 %v1386, 0.0
    %1388 = vset.pattern.permute.xlu0 1
    %1389 = vperm.xlu0 %1388, %v1380
    %v1390 = vpop.permute.xlu0 %1389
    %v1392 = vmul.f32 %v1390, %v327
    %v1393 = vadd.f32 %v1387, %v1392
    %1394 = vset.pattern.permute.xlu0 2
    %1395 = vperm.xlu0 %1394, %v1380
    %v1396 = vpop.permute.xlu0 %1395
    %v1398 = vmul.f32 %v1396, %v478
    %v1399 = vadd.f32 %v1393, %v1398
    %1400 = vset.pattern.permute.xlu0 3
    %1401 = vperm.xlu0 %1400, %v1380
    %v1402 = vpop.permute.xlu0 %1401
    %v1404 = vmul.f32 %v1402, %v629
    %v1405 = vadd.f32 %v1399, %v1404
    %1406 = vset.pattern.permute.xlu0 4
    %1407 = vperm.xlu0 %1406, %v1380
    %v1408 = vpop.permute.xlu0 %1407
    %v1410 = vmul.f32 %v1408, %v780
    %v1411 = vadd.f32 %v1405, %v1410
    %1412 = vset.pattern.permute.xlu0 5
    %1413 = vperm.xlu0 %1412, %v1380
    %v1414 = vpop.permute.xlu0 %1413
    %v1416 = vmul.f32 %v1414, %v931
    %v1417 = vadd.f32 %v1411, %v1416
    %1418 = vset.pattern.permute.xlu0 6
    %1419 = vperm.xlu0 %1418, %v1380
    %v1420 = vpop.permute.xlu0 %1419
    %v1422 = vmul.f32 %v1420, %v1082
    %v1423 = vadd.f32 %v1417, %v1422
    %1424 = vset.pattern.permute.xlu0 7
    %1425 = vperm.xlu0 %1424, %v1380
    %v1426 = vpop.permute.xlu0 %1425
    %v1428 = vmul.f32 %v1426, %v1233
    %v1429 = vadd.f32 %v1423, %v1428
    %s1430 = scalar_lea.vmem %s5, 32
    %v1431 = vld [vmem:[%s1430] sm:$0xf]
    %v1432 = vld [vmem:[%s1430 + $0x4] sm:$0xf]
    %v1433 = vld [vmem:[%s1430 + $0x8] sm:$0xf]
    %v1434 = vld [vmem:[%s1430 + $0xc] sm:$0xf]
    %v1435 = vld [vmem:[%s1430 + $0x10] sm:$0xf]
    %v1436 = vld [vmem:[%s1430 + $0x14] sm:$0xf]
    %v1437 = vld [vmem:[%s1430 + $0x18] sm:$0xf]
    %v1438 = vld [vmem:[%s1430 + $0x1c] sm:$0xf]
    %s1439 = scalar_lea.vmem %s6, 1
    %v1440 = vld [vmem:[%s1439] sm:$0x1]
    %v1442 = vlaneseq
    %v1443 = vshrl.u32 %v1442, 7
    %v1444 = vsub.s32 0, %v1443
    %v1445 = vrot.slane %v1440, %v1444
    %v1455 = vunpack.c.l.b16 %v1431
    %v1456 = vunpack.c.l.b16 %v1432
    %v1457 = vunpack.c.l.b16 %v1433
    %v1458 = vunpack.c.l.b16 %v1434
    %v1459 = vunpack.c.l.b16 %v1435
    %v1460 = vunpack.c.l.b16 %v1436
    %v1461 = vunpack.c.l.b16 %v1437
    %v1462 = vunpack.c.l.b16 %v1438
    %v1463 = vpack.c.b16 %v1456, %v1455
    %v1464 = vpack.c.b16 %v1458, %v1457
    %v1465 = vpack.c.b16 %v1460, %v1459
    %v1466 = vpack.c.b16 %v1462, %v1461
    %1471 = vmatprep.subr.bf16.mxu0 0
    %1472 = vmatpush1.bf16.msra.mxu0 %v1463
    %1473 = vmatprep.subr.bf16.mxu0 0
    %1474 = vmatpush1.bf16.msra.mxu0 %v1464
    %1475 = vmatprep.subr.bf16.mxu0 0
    %1476 = vmatpush1.bf16.msra.mxu0 %v1465
    %1477 = vmatprep.subr.bf16.mxu0 0
    %1478 = vmatpush1.bf16.msra.mxu0 %v1466
    %1479 = vmatprep.subr.bf16.mxu0 0
    %1480 = vmatpush1.bf16.msra.mxu0 0
    %1481 = vmatprep.subr.bf16.mxu0 0
    %1482 = vmatpush1.bf16.msra.mxu0 0
    %1483 = vmatprep.subr.bf16.mxu0 0
    %1484 = vmatpush1.bf16.msra.mxu0 0
    %1485 = vmatprep.subr.bf16.mxu0 0
    %1486 = vmatpush1.bf16.msra.mxu0 0
    %1487 = vmatprep.subr.bf16.mxu0 0
    %1488 = vmatpush1.bf16.msra.mxu0 0
    %1489 = vmatprep.subr.bf16.mxu0 0
    %1490 = vmatpush1.bf16.msra.mxu0 0
    %1491 = vmatprep.subr.bf16.mxu0 0
    %1492 = vmatpush1.bf16.msra.mxu0 0
    %1493 = vmatprep.subr.bf16.mxu0 0
    %1494 = vmatpush1.bf16.msra.mxu0 0
    %1495 = vmatprep.subr.bf16.mxu0 0
    %1496 = vmatpush1.bf16.msra.mxu0 0
    %1497 = vmatprep.subr.bf16.mxu0 0
    %1498 = vmatpush1.bf16.msra.mxu0 0
    %1499 = vmatprep.subr.bf16.mxu0 0
    %1500 = vmatpush1.bf16.msra.mxu0 0
    %1501 = vmatprep.subr.bf16.mxu0 0
    %1502 = vmatpush1.bf16.msra.mxu0 0
    %1503 = vmatprep.mubr.bf16.mxu0 0
    %1504 = vmatmul.mubr.bf16.gmra.mrb[0].mxu0 %v70
    %v1505 = vpop.f32.mrb[0].mxu0
    %v1506 = vadd.f32 %v1445, %v1505
    %v1507 = vpop.f32.mrb[0].mxu0
    %v1508 = vpop.f32.mrb[0].mxu0
    %v1509 = vpop.f32.mrb[0].mxu0
    %1510 = vdwg.mxu0
    %v1511 = vsel %vm1319, %v1506, -inf
    %1512 = vmax.xlane.f32.xlu0 %v1511
    %v1513 = vpop.xlane.xlu0 %1512
    %vm1514 = vcmp.eq.f32.partialorder %v1506, %v1513
    %v1515 = vsel %vm1514, %v1239, 8
    %v1516 = vsel %vm1319, %v1515, 2147483647
    %v1517 = vand.u32 %v1516, 65535
    %v1518 = vshra.s32 %v1516, 16
    %v1519 = vcvt.s32.f32 %v1517
    %v1520 = vcvt.s32.f32 %v1518
    %1521 = vmin.xlane.f32.xlu0 %v1520
    %v1522 = vpop.xlane.xlu0 %1521
    %vm1523 = vcmp.eq.f32.partialorder %v1520, %v1522
    %v1524 = vsel %vm1523, %v1519, inf
    %1525 = vmin.xlane.f32.xlu0 %v1524
    %v1526 = vpop.xlane.xlu0 %1525
    %v1527 = vcvt.f32.s32 %v1526
    %v1528 = vcvt.f32.s32 %v1522
    %v1529 = vshll.u32 %v1528, 16
    %v1530 = vadd.s32 %v1529, %v1527
    %vm1531 = vcmp.eq.s32.totalorder %v1239, %v1530
    %v1532 = vsel %vm1531, -1e+30, %v1506
    %v1533 = vsel %vm1319, %v1532, -inf
    %1534 = vmax.xlane.f32.xlu0 %v1533
    %v1535 = vpop.xlane.xlu0 %1534
    %vm1536 = vcmp.eq.f32.partialorder %v1532, %v1535
    %v1537 = vsel %vm1536, %v1239, 8
    %v1538 = vsel %vm1319, %v1537, 2147483647
    %v1539 = vand.u32 %v1538, 65535
    %v1540 = vshra.s32 %v1538, 16
    %v1541 = vcvt.s32.f32 %v1539
    %v1542 = vcvt.s32.f32 %v1540
    %1543 = vmin.xlane.f32.xlu0 %v1542
    %v1544 = vpop.xlane.xlu0 %1543
    %vm1545 = vcmp.eq.f32.partialorder %v1542, %v1544
    %v1546 = vsel %vm1545, %v1541, inf
    %1547 = vmin.xlane.f32.xlu0 %v1546
    %v1548 = vpop.xlane.xlu0 %1547
    %v1549 = vcvt.f32.s32 %v1548
    %v1550 = vcvt.f32.s32 %v1544
    %v1551 = vshll.u32 %v1550, 16
    %v1552 = vadd.s32 %v1551, %v1549
    %vm1553 = vcmp.eq.s32.totalorder %v1239, %v1552
    %v1554 = vsub.f32 %v1513, %v1513
    %v1555 = vmul.f32 %v1554, 1.442695
    %v1556 = vpow.pop %v1555
    %v1557 = vsub.f32 %v1535, %v1513
    %v1558 = vmul.f32 %v1557, 1.442695
    %v1559 = vpow.pop %v1558
    %v1560 = vadd.f32 %v1556, %v1559
    %v1561 = vrcp.pop %v1560
    %v1562 = vsel %vm1531, 1, 0
    %v1563 = vcvt.s32.f32 %v1562
    %v1564 = vmul.f32 %v1556, %v1561
    %v1565 = vmul.f32 %v1563, %v1564
    %v1566 = vadd.f32 %v1565, 0.0
    %v1567 = vsel %vm1553, 1, 0
    %v1568 = vcvt.s32.f32 %v1567
    %v1569 = vmul.f32 %v1559, %v1561
    %v1570 = vmul.f32 %v1568, %v1569
    %v1571 = vadd.f32 %v1566, %v1570
    %1573 = vset.pattern.permute.xlu0 0
    %1574 = vperm.xlu0 %1573, %v1571
    %v1575 = vpop.permute.xlu0 %1574
    %v1577 = vmul.f32 %v1575, %v176
    %v1578 = vadd.f32 %v1577, 0.0
    %1579 = vset.pattern.permute.xlu0 1
    %1580 = vperm.xlu0 %1579, %v1571
    %v1581 = vpop.permute.xlu0 %1580
    %v1583 = vmul.f32 %v1581, %v327
    %v1584 = vadd.f32 %v1578, %v1583
    %1585 = vset.pattern.permute.xlu0 2
    %1586 = vperm.xlu0 %1585, %v1571
    %v1587 = vpop.permute.xlu0 %1586
    %v1589 = vmul.f32 %v1587, %v478
    %v1590 = vadd.f32 %v1584, %v1589
    %1591 = vset.pattern.permute.xlu0 3
    %1592 = vperm.xlu0 %1591, %v1571
    %v1593 = vpop.permute.xlu0 %1592
    %v1595 = vmul.f32 %v1593, %v629
    %v1596 = vadd.f32 %v1590, %v1595
    %1597 = vset.pattern.permute.xlu0 4
    %1598 = vperm.xlu0 %1597, %v1571
    %v1599 = vpop.permute.xlu0 %1598
    %v1601 = vmul.f32 %v1599, %v780
    %v1602 = vadd.f32 %v1596, %v1601
    %1603 = vset.pattern.permute.xlu0 5
    %1604 = vperm.xlu0 %1603, %v1571
    %v1605 = vpop.permute.xlu0 %1604
    %v1607 = vmul.f32 %v1605, %v931
    %v1608 = vadd.f32 %v1602, %v1607
    %1609 = vset.pattern.permute.xlu0 6
    %1610 = vperm.xlu0 %1609, %v1571
    %v1611 = vpop.permute.xlu0 %1610
    %v1613 = vmul.f32 %v1611, %v1082
    %v1614 = vadd.f32 %v1608, %v1613
    %1615 = vset.pattern.permute.xlu0 7
    %1616 = vperm.xlu0 %1615, %v1571
    %v1617 = vpop.permute.xlu0 %1616
    %v1619 = vmul.f32 %v1617, %v1233
    %v1620 = vadd.f32 %v1614, %v1619
    %s1621 = scalar_lea.vmem %s5, 64
    %v1622 = vld [vmem:[%s1621] sm:$0xf]
    %v1623 = vld [vmem:[%s1621 + $0x4] sm:$0xf]
    %v1624 = vld [vmem:[%s1621 + $0x8] sm:$0xf]
    %v1625 = vld [vmem:[%s1621 + $0xc] sm:$0xf]
    %v1626 = vld [vmem:[%s1621 + $0x10] sm:$0xf]
    %v1627 = vld [vmem:[%s1621 + $0x14] sm:$0xf]
    %v1628 = vld [vmem:[%s1621 + $0x18] sm:$0xf]
    %v1629 = vld [vmem:[%s1621 + $0x1c] sm:$0xf]
    %s1630 = scalar_lea.vmem %s6, 2
    %v1631 = vld [vmem:[%s1630] sm:$0x1]
    %v1633 = vlaneseq
    %v1634 = vshrl.u32 %v1633, 7
    %v1635 = vsub.s32 0, %v1634
    %v1636 = vrot.slane %v1631, %v1635
    %v1646 = vunpack.c.l.b16 %v1622
    %v1647 = vunpack.c.l.b16 %v1623
    %v1648 = vunpack.c.l.b16 %v1624
    %v1649 = vunpack.c.l.b16 %v1625
    %v1650 = vunpack.c.l.b16 %v1626
    %v1651 = vunpack.c.l.b16 %v1627
    %v1652 = vunpack.c.l.b16 %v1628
    %v1653 = vunpack.c.l.b16 %v1629
    %v1654 = vpack.c.b16 %v1647, %v1646
    %v1655 = vpack.c.b16 %v1649, %v1648
    %v1656 = vpack.c.b16 %v1651, %v1650
    %v1657 = vpack.c.b16 %v1653, %v1652
    %1662 = vmatprep.subr.bf16.mxu0 0
    %1663 = vmatpush1.bf16.msra.mxu0 %v1654
    %1664 = vmatprep.subr.bf16.mxu0 0
    %1665 = vmatpush1.bf16.msra.mxu0 %v1655
    %1666 = vmatprep.subr.bf16.mxu0 0
    %1667 = vmatpush1.bf16.msra.mxu0 %v1656
    %1668 = vmatprep.subr.bf16.mxu0 0
    %1669 = vmatpush1.bf16.msra.mxu0 %v1657
    %1670 = vmatprep.subr.bf16.mxu0 0
    %1671 = vmatpush1.bf16.msra.mxu0 0
    %1672 = vmatprep.subr.bf16.mxu0 0
    %1673 = vmatpush1.bf16.msra.mxu0 0
    %1674 = vmatprep.subr.bf16.mxu0 0
    %1675 = vmatpush1.bf16.msra.mxu0 0
    %1676 = vmatprep.subr.bf16.mxu0 0
    %1677 = vmatpush1.bf16.msra.mxu0 0
    %1678 = vmatprep.subr.bf16.mxu0 0
    %1679 = vmatpush1.bf16.msra.mxu0 0
    %1680 = vmatprep.subr.bf16.mxu0 0
    %1681 = vmatpush1.bf16.msra.mxu0 0
    %1682 = vmatprep.subr.bf16.mxu0 0
    %1683 = vmatpush1.bf16.msra.mxu0 0
    %1684 = vmatprep.subr.bf16.mxu0 0
    %1685 = vmatpush1.bf16.msra.mxu0 0
    %1686 = vmatprep.subr.bf16.mxu0 0
    %1687 = vmatpush1.bf16.msra.mxu0 0
    %1688 = vmatprep.subr.bf16.mxu0 0
    %1689 = vmatpush1.bf16.msra.mxu0 0
    %1690 = vmatprep.subr.bf16.mxu0 0
    %1691 = vmatpush1.bf16.msra.mxu0 0
    %1692 = vmatprep.subr.bf16.mxu0 0
    %1693 = vmatpush1.bf16.msra.mxu0 0
    %1694 = vmatprep.mubr.bf16.mxu0 0
    %1695 = vmatmul.mubr.bf16.gmra.mrb[0].mxu0 %v70
    %v1696 = vpop.f32.mrb[0].mxu0
    %v1697 = vadd.f32 %v1636, %v1696
    %v1698 = vpop.f32.mrb[0].mxu0
    %v1699 = vpop.f32.mrb[0].mxu0
    %v1700 = vpop.f32.mrb[0].mxu0
    %1701 = vdwg.mxu0
    %v1702 = vsel %vm1319, %v1697, -inf
    %1703 = vmax.xlane.f32.xlu0 %v1702
    %v1704 = vpop.xlane.xlu0 %1703
    %vm1705 = vcmp.eq.f32.partialorder %v1697, %v1704
    %v1706 = vsel %vm1705, %v1239, 8
    %v1707 = vsel %vm1319, %v1706, 2147483647
    %v1708 = vand.u32 %v1707, 65535
    %v1709 = vshra.s32 %v1707, 16
    %v1710 = vcvt.s32.f32 %v1708
    %v1711 = vcvt.s32.f32 %v1709
    %1712 = vmin.xlane.f32.xlu0 %v1711
    %v1713 = vpop.xlane.xlu0 %1712
    %vm1714 = vcmp.eq.f32.partialorder %v1711, %v1713
    %v1715 = vsel %vm1714, %v1710, inf
    %1716 = vmin.xlane.f32.xlu0 %v1715
    %v1717 = vpop.xlane.xlu0 %1716
    %v1718 = vcvt.f32.s32 %v1717
    %v1719 = vcvt.f32.s32 %v1713
    %v1720 = vshll.u32 %v1719, 16
    %v1721 = vadd.s32 %v1720, %v1718
    %vm1722 = vcmp.eq.s32.totalorder %v1239, %v1721
    %v1723 = vsel %vm1722, -1e+30, %v1697
    %v1724 = vsel %vm1319, %v1723, -inf
    %1725 = vmax.xlane.f32.xlu0 %v1724
    %v1726 = vpop.xlane.xlu0 %1725
    %vm1727 = vcmp.eq.f32.partialorder %v1723, %v1726
    %v1728 = vsel %vm1727, %v1239, 8
    %v1729 = vsel %vm1319, %v1728, 2147483647
    %v1730 = vand.u32 %v1729, 65535
    %v1731 = vshra.s32 %v1729, 16
    %v1732 = vcvt.s32.f32 %v1730
    %v1733 = vcvt.s32.f32 %v1731
    %1734 = vmin.xlane.f32.xlu0 %v1733
    %v1735 = vpop.xlane.xlu0 %1734
    %vm1736 = vcmp.eq.f32.partialorder %v1733, %v1735
    %v1737 = vsel %vm1736, %v1732, inf
    %1738 = vmin.xlane.f32.xlu0 %v1737
    %v1739 = vpop.xlane.xlu0 %1738
    %v1740 = vcvt.f32.s32 %v1739
    %v1741 = vcvt.f32.s32 %v1735
    %v1742 = vshll.u32 %v1741, 16
    %v1743 = vadd.s32 %v1742, %v1740
    %vm1744 = vcmp.eq.s32.totalorder %v1239, %v1743
    %v1745 = vsub.f32 %v1704, %v1704
    %v1746 = vmul.f32 %v1745, 1.442695
    %v1747 = vpow.pop %v1746
    %v1748 = vsub.f32 %v1726, %v1704
    %v1749 = vmul.f32 %v1748, 1.442695
    %v1750 = vpow.pop %v1749
    %v1751 = vadd.f32 %v1747, %v1750
    %v1752 = vrcp.pop %v1751
    %v1753 = vsel %vm1722, 1, 0
    %v1754 = vcvt.s32.f32 %v1753
    %v1755 = vmul.f32 %v1747, %v1752
    %v1756 = vmul.f32 %v1754, %v1755
    %v1757 = vadd.f32 %v1756, 0.0
    %v1758 = vsel %vm1744, 1, 0
    %v1759 = vcvt.s32.f32 %v1758
    %v1760 = vmul.f32 %v1750, %v1752
    %v1761 = vmul.f32 %v1759, %v1760
    %v1762 = vadd.f32 %v1757, %v1761
    %1764 = vset.pattern.permute.xlu0 0
    %1765 = vperm.xlu0 %1764, %v1762
    %v1766 = vpop.permute.xlu0 %1765
    %v1768 = vmul.f32 %v1766, %v176
    %v1769 = vadd.f32 %v1768, 0.0
    %1770 = vset.pattern.permute.xlu0 1
    %1771 = vperm.xlu0 %1770, %v1762
    %v1772 = vpop.permute.xlu0 %1771
    %v1774 = vmul.f32 %v1772, %v327
    %v1775 = vadd.f32 %v1769, %v1774
    %1776 = vset.pattern.permute.xlu0 2
    %1777 = vperm.xlu0 %1776, %v1762
    %v1778 = vpop.permute.xlu0 %1777
    %v1780 = vmul.f32 %v1778, %v478
    %v1781 = vadd.f32 %v1775, %v1780
    %1782 = vset.pattern.permute.xlu0 3
    %1783 = vperm.xlu0 %1782, %v1762
    %v1784 = vpop.permute.xlu0 %1783
    %v1786 = vmul.f32 %v1784, %v629
    %v1787 = vadd.f32 %v1781, %v1786
    %1788 = vset.pattern.permute.xlu0 4
    %1789 = vperm.xlu0 %1788, %v1762
    %v1790 = vpop.permute.xlu0 %1789
    %v1792 = vmul.f32 %v1790, %v780
    %v1793 = vadd.f32 %v1787, %v1792
    %1794 = vset.pattern.permute.xlu0 5
    %1795 = vperm.xlu0 %1794, %v1762
    %v1796 = vpop.permute.xlu0 %1795
    %v1798 = vmul.f32 %v1796, %v931
    %v1799 = vadd.f32 %v1793, %v1798
    %1800 = vset.pattern.permute.xlu0 6
    %1801 = vperm.xlu0 %1800, %v1762
    %v1802 = vpop.permute.xlu0 %1801
    %v1804 = vmul.f32 %v1802, %v1082
    %v1805 = vadd.f32 %v1799, %v1804
    %1806 = vset.pattern.permute.xlu0 7
    %1807 = vperm.xlu0 %1806, %v1762
    %v1808 = vpop.permute.xlu0 %1807
    %v1810 = vmul.f32 %v1808, %v1233
    %v1811 = vadd.f32 %v1805, %v1810
    %1813 = vrot.lane.b32.xlu0 %v1620, 32
    %v1814 = vpop.permute.xlu0 %1813
    %1817 = vrot.lane.b32.xlu0 %v1811, 64
    %v1818 = vpop.permute.xlu0 %1817
    %v1820 = vsel %vm137, %v1429, %v1814
    %v1821 = vsel %vm68, %v1820, %v1818
    %vm1822 = vcmask 785408
    %v1823 = vsel %vm1822, %v1821, 0.0
    %1824 = vst [vmem:[#allocation2] sm:$0xff] %v1823
    // Predicated region
    $region30: #{tpu_custom_call.1} parent=1 // pred_check
      _
    $region31: #{tpu_custom_call.1} parent=1 // pred_check_branch
      %1826 = sbr.rel (0) target = $region33
    $region32: #{tpu_custom_call.1} parent=1 // pred_region
      %s1828 = ssub.s32 128, 128
      %1829 = vsyncadd [#allocation3], %s1828
      %s1831 = sshll.u32 [#allocation2], 4
      %s1832 = int_to_ptr.vmem [resolvable:$true] %s1831
      %1834 = dma.vmem_to_hbm [thread:$0]  %s1832, 128, %s7, [#allocation3]
    $region33: #{tpu_custom_call.1} parent=1 // pred_fallthru
      _
    // Predicated region
    $region34: #{tpu_custom_call.1} parent=1 // pred_check
      _
    $region35: #{tpu_custom_call.1} parent=1 // pred_check_branch
      %1836 = sbr.rel (0) target = $region37
    $region36: #{tpu_custom_call.1} parent=1 // pred_region
      %1837 = dma.done [#allocation3], 128
    $region37: #{tpu_custom_call.1} parent=1 // pred_fallthru
      _
    %1838 = vsyncpa [#allocation3], 1

</llo_original>
